<compile_context>
chip_gen: v5e
topology: v5e:2x2
jax: 0.10.0
libtpu: 0.0.40
codegen_flags: <defaults>
</compile_context>

<pallas_src>
import jax
import jax.numpy as jnp
from jax.experimental import pallas as pl
from jax.experimental.pallas import tpu as pltpu


_LANES = 128  # lane-dense output width


def _round_up(x, m):
    return (x + m - 1) // m * m


# ----------------------------------------------------------------------------
# Fused Pallas kernel: num_layers-layer LSTM over T steps + linear + score
# ----------------------------------------------------------------------------
def _make_fused_kernel(num_layers, B, T, R, H):
    def kernel(*refs):
        x_ref = refs[0]                               # (T*R, D) time-major rows
        w_refs = refs[1:1 + 3 * num_layers]           # per layer: w_ih (D_l,4H), w_hh (H,4H), b (1,4H)
        wlin_ref = refs[1 + 3 * num_layers]           # (1, H)
        blin_ref = refs[2 + 3 * num_layers]           # (1, 1)
        out_ref = refs[3 + 3 * num_layers]            # (R, _LANES)
        ys_ref = refs[4 + 3 * num_layers]             # VMEM scratch (T*R, H)

        seq = x_ref[...]                              # (T*R, D_l) current layer input

        h_last = None
        for l in range(num_layers):
            # Hoisted weight loads (outside the unrolled time loop).
            wih = w_refs[3 * l][...]                  # (D_l, 4H)
            whh = w_refs[3 * l + 1][...]              # (H, 4H)
            bias = w_refs[3 * l + 2][...]             # (1, 4H)

            # Input projection for ALL timesteps in one MXU pass (off the
            # serial h->h dependency chain); bias folded in here once.
            z_in = jnp.dot(seq, wih,
                           preferred_element_type=jnp.float32) + bias  # (T*R, 4H)

            h = jnp.zeros((R, H), jnp.float32)
            c = jnp.zeros((R, H), jnp.float32)
            for t in range(T):                        # static unroll, T small
                # Only the recurrent matmul sits on the critical path.
                z = z_in[t * R:(t + 1) * R, :] + jnp.dot(
                    h, whh, preferred_element_type=jnp.float32)         # (R, 4H)
                # PyTorch gate order along the fused 4H axis: i | f | g | o.
                i_g = jax.nn.sigmoid(z[:, 0:H])
                f_g = jax.nn.sigmoid(z[:, H:2 * H])
                g_g = jnp.tanh(z[:, 2 * H:3 * H])
                o_g = jax.nn.sigmoid(z[:, 3 * H:4 * H])
                c = f_g * c + i_g * g_g
                h = o_g * jnp.tanh(c)
                if l < num_layers - 1:
                    # 8-aligned sublane store; feeds the next layer's fused
                    # input projection.
                    ys_ref[t * R:(t + 1) * R, :] = h
            h_last = h                                # top layer keeps only last step
            if l < num_layers - 1:
                seq = ys_ref[...]                     # (T*R, H)

        # Final Linear(H, 1): VPU broadcast-mul + lane reduction (no degenerate
        # (H, 1) MXU matmul).
        logits = (jnp.sum(h_last * wlin_ref[...], axis=-1, keepdims=True)
                  + blin_ref[...])                    # (R, 1)
        e = jnp.exp(logits)
        e0 = e[0:B, :]                                # s0 branch rows
        e1 = e[B:2 * B, :]                            # s1 branch rows
        score = e0 / (e0 + e1)                        # (B, 1)

        # One lane-dense output block for the whole batch.
        out_ref[...] = jnp.zeros((R, _LANES), jnp.float32)
        out_ref[0:B, :] = jnp.broadcast_to(score, (B, _LANES))

    return kernel


# ----------------------------------------------------------------------------
# Model wrapper: embedding gather + branch folding in plain JAX, 1 pallas_call
# ----------------------------------------------------------------------------
def lstm_model_forward(params, s0_tokens, s1_tokens, lens0=None, lens1=None):
    del lens0, lens1                                  # unused by the reference forward
    emb = params["embedding"]                         # (V, D)
    B, T = s0_tokens.shape
    D = emb.shape[1]
    layers = params["lstm"]
    num_layers = len(layers)
    H = layers[0]["w_hh"].shape[0]
    R = max(_round_up(2 * B, 8), 8)                   # rows per timestep (sublane quantum)

    # Embedding lookup, fold both branches of the whole batch into the row
    # (sublane) axis: rows [0:B) = s0, rows [B:2B) = s1, rest zero pad.
    x0 = jnp.take(emb, s0_tokens, axis=0)             # (B, T, D)
    x1 = jnp.take(emb, s1_tokens, axis=0)             # (B, T, D)
    x = jnp.concatenate([x0, x1], axis=0)             # (2B, T, D)
    x = jnp.pad(x, ((0, R - 2 * B), (0, 0), (0, 0)))  # (R, T, D)
    x = jnp.transpose(x, (1, 0, 2)).reshape(T * R, D) # time-major flat rows

    args = [x]
    in_specs = [pl.BlockSpec((T * R, D), lambda i: (0, 0))]
    for layer in layers:
        for name in ("w_ih", "w_hh", "b"):
            w = layer[name]
            args.append(w)
            in_specs.append(pl.BlockSpec(w.shape, lambda i, nd=w.ndim: (0,) * nd))
    for w in (params["linear_w"], params["linear_b"]):
        args.append(w)
        in_specs.append(pl.BlockSpec(w.shape, lambda i, nd=w.ndim: (0,) * nd))

    out = pl.pallas_call(
        _make_fused_kernel(num_layers, B, T, R, H),
        out_shape=jax.ShapeDtypeStruct((R, _LANES), jnp.float32),
        grid_spec=pltpu.PrefetchScalarGridSpec(
            num_scalar_prefetch=0,
            grid=(1,),                                # whole batch in one step at this size
            in_specs=in_specs,
            out_specs=pl.BlockSpec((R, _LANES), lambda i: (0, 0)),
            scratch_shapes=[pltpu.VMEM((T * R, H), jnp.float32)],
        ),
        compiler_params=pltpu.CompilerParams(
            dimension_semantics=("arbitrary",)),
    )(*args)
    return out[0:B, 0:1]                              # (B, 1)


# ----------------------------------------------------------------------------
# Pure-JAX reference (for correctness check) — same fused-gate weight layout
# ----------------------------------------------------------------------------
def lstm_model_reference(params, s0_tokens, s1_tokens):
    emb = params["embedding"]
    H = params["lstm"][0]["w_hh"].shape[0]

    def run_layer(x_tbd, layer):
        wih, whh, b = layer["w_ih"], layer["w_hh"], layer["b"]
        Bb = x_tbd.shape[1]

        def step(carry, x_t):
            h, c = carry
            z = x_t @ wih + h @ whh + b               # (Bb, 4H), gate order i|f|g|o
            i = jax.nn.sigmoid(z[:, 0:H])
            f = jax.nn.sigmoid(z[:, H:2 * H])
            g = jnp.tanh(z[:, 2 * H:3 * H])
            o = jax.nn.sigmoid(z[:, 3 * H:4 * H])
            c = f * c + i * g
            h = o * jnp.tanh(c)
            return (h, c), h

        init = (jnp.zeros((Bb, H), jnp.float32), jnp.zeros((Bb, H), jnp.float32))
        _, ys = jax.lax.scan(step, init, x_tbd)
        return ys

    def run_branch(tokens):
        x = jnp.transpose(jnp.take(emb, tokens, axis=0), (1, 0, 2))
        for layer in params["lstm"]:
            x = run_layer(x, layer)
        return x[-1]

    h0, h1 = run_branch(s0_tokens), run_branch(s1_tokens)
    s0 = jnp.sum(h0 * params["linear_w"], axis=-1, keepdims=True) + params["linear_b"]
    s1 = jnp.sum(h1 * params["linear_w"], axis=-1, keepdims=True) + params["linear_b"]
    e0, e1 = jnp.exp(s0), jnp.exp(s1)
    return e0 / (e0 + e1)


# ----------------------------------------------------------------------------
# Deterministic parameter init (fused-gate weight layout, gate order i|f|g|o)
# ----------------------------------------------------------------------------
def init_params(key, vocab, input_size, hidden_size, num_layers):
    keys = jax.random.split(key, 1 + 3 * num_layers + 2)
    k = 1.0 / jnp.sqrt(hidden_size)
    params = {
        "embedding": jax.random.normal(keys[0], (vocab, input_size), jnp.float32) * 0.1,
    }
    layers = []
    for l in range(num_layers):
        d_in = input_size if l == 0 else hidden_size
        kw = keys[1 + 3 * l: 4 + 3 * l]
        layers.append({
            # fused layout: (in, 4H) / (H, 4H) with gate blocks [i | f | g | o]
            "w_ih": jax.random.uniform(kw[0], (d_in, 4 * hidden_size), jnp.float32, -k, k),
            "w_hh": jax.random.uniform(kw[1], (hidden_size, 4 * hidden_size), jnp.float32, -k, k),
            # combined bias = b_ih + b_hh
            "b": jax.random.uniform(kw[2], (1, 4 * hidden_size), jnp.float32, -2 * k, 2 * k),
        })
    params["lstm"] = layers
    params["linear_w"] = jax.random.uniform(keys[-2], (1, hidden_size), jnp.float32, -k, k)
    params["linear_b"] = jax.random.uniform(keys[-1], (1, 1), jnp.float32, -k, k)
    return params


if __name__ == "__main__":
    VOCAB = 50
    B, T = 2, 8
    INPUT_SIZE = 32
    HIDDEN_SIZE = 32
    NUM_LAYERS = 2

    key = jax.random.PRNGKey(0)
    kp, k0, k1 = jax.random.split(key, 3)
    params = init_params(kp, VOCAB, INPUT_SIZE, HIDDEN_SIZE, NUM_LAYERS)

    s0_tokens = jax.random.randint(k0, (B, T), 0, VOCAB, dtype=jnp.int32)
    s1_tokens = jax.random.randint(k1, (B, T), 0, VOCAB, dtype=jnp.int32)
    # lens0 / lens1 from the reference forward are unused by its computation.

    out = jax.block_until_ready(
        jax.jit(lstm_model_forward)(params, s0_tokens, s1_tokens))
    ref = jax.block_until_ready(
        lstm_model_reference(params, s0_tokens, s1_tokens))

    assert out.shape == (B, 1), out.shape
    assert jnp.allclose(out, ref, atol=1e-3, rtol=1e-3), (out, ref)

    print("KERNEL_OK")
</pallas_src>

<mosaic_0001>
module attributes {stable_mosaic.version = 11 : i64} {
  func.func @kernel(%arg0: i32, %arg1: memref<64x32xf32, #tpu.memory_space<vmem>>, %arg2: memref<32x128xf32, #tpu.memory_space<vmem>>, %arg3: memref<32x128xf32, #tpu.memory_space<vmem>>, %arg4: memref<1x128xf32, #tpu.memory_space<vmem>>, %arg5: memref<32x128xf32, #tpu.memory_space<vmem>>, %arg6: memref<32x128xf32, #tpu.memory_space<vmem>>, %arg7: memref<1x128xf32, #tpu.memory_space<vmem>>, %arg8: memref<1x32xf32, #tpu.memory_space<vmem>>, %arg9: memref<1x1xf32, #tpu.memory_space<vmem>>, %arg10: memref<8x128xf32, #tpu.memory_space<vmem>>, %arg11: memref<64x32xf32, #tpu.memory_space<vmem>>) attributes {dimension_semantics = [#tpu.dimension_semantics<arbitrary>], iteration_bounds = array<i64: 1>, scalar_prefetch = 0 : i64, scratch_operands = 1 : i64, tpu.core_type = #tpu.core_type<tc>, window_params = [{pipeline_mode = #tpu.pipeline_mode<synchronous>, transform_indices = @transform_0, window_bounds = array<i64: 64, 32>}, {pipeline_mode = #tpu.pipeline_mode<synchronous>, transform_indices = @transform_1, window_bounds = array<i64: 32, 128>}, {pipeline_mode = #tpu.pipeline_mode<synchronous>, transform_indices = @transform_2, window_bounds = array<i64: 32, 128>}, {pipeline_mode = #tpu.pipeline_mode<synchronous>, transform_indices = @transform_3, window_bounds = array<i64: 1, 128>}, {pipeline_mode = #tpu.pipeline_mode<synchronous>, transform_indices = @transform_4, window_bounds = array<i64: 32, 128>}, {pipeline_mode = #tpu.pipeline_mode<synchronous>, transform_indices = @transform_5, window_bounds = array<i64: 32, 128>}, {pipeline_mode = #tpu.pipeline_mode<synchronous>, transform_indices = @transform_6, window_bounds = array<i64: 1, 128>}, {pipeline_mode = #tpu.pipeline_mode<synchronous>, transform_indices = @transform_7, window_bounds = array<i64: 1, 32>}, {pipeline_mode = #tpu.pipeline_mode<synchronous>, transform_indices = @transform_8, window_bounds = array<i64: 1, 1>}, {pipeline_mode = #tpu.pipeline_mode<synchronous>, transform_indices = @transform_9, window_bounds = array<i64: 8, 128>}]} {
    %c0 = arith.constant 0 : index
    %c0_0 = arith.constant 0 : index
    %0 = vector.load %arg1[%c0, %c0_0] : memref<64x32xf32, #tpu.memory_space<vmem>>, vector<64x32xf32>
    %c0_1 = arith.constant 0 : index
    %c0_2 = arith.constant 0 : index
    %1 = vector.load %arg2[%c0_1, %c0_2] : memref<32x128xf32, #tpu.memory_space<vmem>>, vector<32x128xf32>
    %c0_3 = arith.constant 0 : index
    %c0_4 = arith.constant 0 : index
    %2 = vector.load %arg3[%c0_3, %c0_4] : memref<32x128xf32, #tpu.memory_space<vmem>>, vector<32x128xf32>
    %c0_5 = arith.constant 0 : index
    %c0_6 = arith.constant 0 : index
    %3 = vector.load %arg4[%c0_5, %c0_6] : memref<1x128xf32, #tpu.memory_space<vmem>>, vector<1x128xf32>
    %cst = arith.constant dense<0.000000e+00> : vector<64x128xf32>
    %4 = tpu.matmul %0, %1, %cst {dimension_numbers = #tpu.dot_dimension_numbers<[1], [0], [0], [1], [0, 0, 1, 1], [], []>} : vector<64x32xf32>, vector<32x128xf32>, vector<64x128xf32> -> vector<64x128xf32>
    %5 = vector.broadcast %3 : vector<1x128xf32> to vector<64x128xf32>
    %6 = arith.addf %4, %5 : vector<64x128xf32>
    %cst_7 = arith.constant 0.000000e+00 : f32
    %7 = vector.broadcast %cst_7 : f32 to vector<8x32xf32>
    %cst_8 = arith.constant 0.000000e+00 : f32
    %8 = vector.broadcast %cst_8 : f32 to vector<8x32xf32>
    %9 = vector.extract_strided_slice %6 {offsets = [0, 0], sizes = [8, 128], strides = [1, 1]} : vector<64x128xf32> to vector<8x128xf32>
    %cst_9 = arith.constant dense<0.000000e+00> : vector<8x128xf32>
    %10 = tpu.matmul %7, %2, %cst_9 {dimension_numbers = #tpu.dot_dimension_numbers<[1], [0], [0], [1], [0, 0, 1, 1], [], []>} : vector<8x32xf32>, vector<32x128xf32>, vector<8x128xf32> -> vector<8x128xf32>
    %11 = arith.addf %9, %10 : vector<8x128xf32>
    %12 = vector.extract_strided_slice %11 {offsets = [0, 0], sizes = [8, 32], strides = [1, 1]} : vector<8x128xf32> to vector<8x32xf32>
    %13 = arith.negf %12 : vector<8x32xf32>
    %14 = math.exp %13 : vector<8x32xf32>
    %cst_10 = arith.constant 1.000000e+00 : f32
    %15 = vector.broadcast %cst_10 : f32 to vector<8x32xf32>
    %16 = arith.addf %15, %14 : vector<8x32xf32>
    %17 = arith.divf %15, %16 : vector<8x32xf32>
    %18 = vector.extract_strided_slice %11 {offsets = [0, 32], sizes = [8, 32], strides = [1, 1]} : vector<8x128xf32> to vector<8x32xf32>
    %19 = arith.negf %18 : vector<8x32xf32>
    %20 = math.exp %19 : vector<8x32xf32>
    %cst_11 = arith.constant 1.000000e+00 : f32
    %21 = vector.broadcast %cst_11 : f32 to vector<8x32xf32>
    %22 = arith.addf %21, %20 : vector<8x32xf32>
    %23 = arith.divf %21, %22 : vector<8x32xf32>
    %24 = vector.extract_strided_slice %11 {offsets = [0, 64], sizes = [8, 32], strides = [1, 1]} : vector<8x128xf32> to vector<8x32xf32>
    %25 = math.tanh %24 : vector<8x32xf32>
    %26 = vector.extract_strided_slice %11 {offsets = [0, 96], sizes = [8, 32], strides = [1, 1]} : vector<8x128xf32> to vector<8x32xf32>
    %27 = arith.negf %26 : vector<8x32xf32>
    %28 = math.exp %27 : vector<8x32xf32>
    %cst_12 = arith.constant 1.000000e+00 : f32
    %29 = vector.broadcast %cst_12 : f32 to vector<8x32xf32>
    %30 = arith.addf %29, %28 : vector<8x32xf32>
    %31 = arith.divf %29, %30 : vector<8x32xf32>
    %32 = arith.mulf %23, %8 : vector<8x32xf32>
    %33 = arith.mulf %17, %25 : vector<8x32xf32>
    %34 = arith.addf %32, %33 : vector<8x32xf32>
    %35 = math.tanh %34 : vector<8x32xf32>
    %36 = arith.mulf %31, %35 : vector<8x32xf32>
    %c0_13 = arith.constant 0 : index
    %c0_14 = arith.constant 0 : index
    %37 = vector.load %arg11[%c0_13, %c0_14] : memref<64x32xf32, #tpu.memory_space<vmem>>, vector<8x32xf32>
    tpu.vector_store %arg11[%c0_13, %c0_14], %36 {strides = array<i32>} : memref<64x32xf32, #tpu.memory_space<vmem>>, vector<8x32xf32>,
    %38 = vector.extract_strided_slice %6 {offsets = [8, 0], sizes = [8, 128], strides = [1, 1]} : vector<64x128xf32> to vector<8x128xf32>
    %cst_15 = arith.constant dense<0.000000e+00> : vector<8x128xf32>
    %39 = tpu.matmul %36, %2, %cst_15 {dimension_numbers = #tpu.dot_dimension_numbers<[1], [0], [0], [1], [0, 0, 1, 1], [], []>} : vector<8x32xf32>, vector<32x128xf32>, vector<8x128xf32> -> vector<8x128xf32>
    %40 = arith.addf %38, %39 : vector<8x128xf32>
    %41 = vector.extract_strided_slice %40 {offsets = [0, 0], sizes = [8, 32], strides = [1, 1]} : vector<8x128xf32> to vector<8x32xf32>
    %42 = arith.negf %41 : vector<8x32xf32>
    %43 = math.exp %42 : vector<8x32xf32>
    %cst_16 = arith.constant 1.000000e+00 : f32
    %44 = vector.broadcast %cst_16 : f32 to vector<8x32xf32>
    %45 = arith.addf %44, %43 : vector<8x32xf32>
    %46 = arith.divf %44, %45 : vector<8x32xf32>
    %47 = vector.extract_strided_slice %40 {offsets = [0, 32], sizes = [8, 32], strides = [1, 1]} : vector<8x128xf32> to vector<8x32xf32>
    %48 = arith.negf %47 : vector<8x32xf32>
    %49 = math.exp %48 : vector<8x32xf32>
    %cst_17 = arith.constant 1.000000e+00 : f32
    %50 = vector.broadcast %cst_17 : f32 to vector<8x32xf32>
    %51 = arith.addf %50, %49 : vector<8x32xf32>
    %52 = arith.divf %50, %51 : vector<8x32xf32>
    %53 = vector.extract_strided_slice %40 {offsets = [0, 64], sizes = [8, 32], strides = [1, 1]} : vector<8x128xf32> to vector<8x32xf32>
    %54 = math.tanh %53 : vector<8x32xf32>
    %55 = vector.extract_strided_slice %40 {offsets = [0, 96], sizes = [8, 32], strides = [1, 1]} : vector<8x128xf32> to vector<8x32xf32>
    %56 = arith.negf %55 : vector<8x32xf32>
    %57 = math.exp %56 : vector<8x32xf32>
    %cst_18 = arith.constant 1.000000e+00 : f32
    %58 = vector.broadcast %cst_18 : f32 to vector<8x32xf32>
    %59 = arith.addf %58, %57 : vector<8x32xf32>
    %60 = arith.divf %58, %59 : vector<8x32xf32>
    %61 = arith.mulf %52, %34 : vector<8x32xf32>
    %62 = arith.mulf %46, %54 : vector<8x32xf32>
    %63 = arith.addf %61, %62 : vector<8x32xf32>
    %64 = math.tanh %63 : vector<8x32xf32>
    %65 = arith.mulf %60, %64 : vector<8x32xf32>
    %c8 = arith.constant 8 : index
    %c0_19 = arith.constant 0 : index
    %66 = vector.load %arg11[%c8, %c0_19] : memref<64x32xf32, #tpu.memory_space<vmem>>, vector<8x32xf32>
    tpu.vector_store %arg11[%c8, %c0_19], %65 {strides = array<i32>} : memref<64x32xf32, #tpu.memory_space<vmem>>, vector<8x32xf32>,
    %67 = vector.extract_strided_slice %6 {offsets = [16, 0], sizes = [8, 128], strides = [1, 1]} : vector<64x128xf32> to vector<8x128xf32>
    %cst_20 = arith.constant dense<0.000000e+00> : vector<8x128xf32>
    %68 = tpu.matmul %65, %2, %cst_20 {dimension_numbers = #tpu.dot_dimension_numbers<[1], [0], [0], [1], [0, 0, 1, 1], [], []>} : vector<8x32xf32>, vector<32x128xf32>, vector<8x128xf32> -> vector<8x128xf32>
    %69 = arith.addf %67, %68 : vector<8x128xf32>
    %70 = vector.extract_strided_slice %69 {offsets = [0, 0], sizes = [8, 32], strides = [1, 1]} : vector<8x128xf32> to vector<8x32xf32>
    %71 = arith.negf %70 : vector<8x32xf32>
    %72 = math.exp %71 : vector<8x32xf32>
    %cst_21 = arith.constant 1.000000e+00 : f32
    %73 = vector.broadcast %cst_21 : f32 to vector<8x32xf32>
    %74 = arith.addf %73, %72 : vector<8x32xf32>
    %75 = arith.divf %73, %74 : vector<8x32xf32>
    %76 = vector.extract_strided_slice %69 {offsets = [0, 32], sizes = [8, 32], strides = [1, 1]} : vector<8x128xf32> to vector<8x32xf32>
    %77 = arith.negf %76 : vector<8x32xf32>
    %78 = math.exp %77 : vector<8x32xf32>
    %cst_22 = arith.constant 1.000000e+00 : f32
    %79 = vector.broadcast %cst_22 : f32 to vector<8x32xf32>
    %80 = arith.addf %79, %78 : vector<8x32xf32>
    %81 = arith.divf %79, %80 : vector<8x32xf32>
    %82 = vector.extract_strided_slice %69 {offsets = [0, 64], sizes = [8, 32], strides = [1, 1]} : vector<8x128xf32> to vector<8x32xf32>
    %83 = math.tanh %82 : vector<8x32xf32>
    %84 = vector.extract_strided_slice %69 {offsets = [0, 96], sizes = [8, 32], strides = [1, 1]} : vector<8x128xf32> to vector<8x32xf32>
    %85 = arith.negf %84 : vector<8x32xf32>
    %86 = math.exp %85 : vector<8x32xf32>
    %cst_23 = arith.constant 1.000000e+00 : f32
    %87 = vector.broadcast %cst_23 : f32 to vector<8x32xf32>
    %88 = arith.addf %87, %86 : vector<8x32xf32>
    %89 = arith.divf %87, %88 : vector<8x32xf32>
    %90 = arith.mulf %81, %63 : vector<8x32xf32>
    %91 = arith.mulf %75, %83 : vector<8x32xf32>
    %92 = arith.addf %90, %91 : vector<8x32xf32>
    %93 = math.tanh %92 : vector<8x32xf32>
    %94 = arith.mulf %89, %93 : vector<8x32xf32>
    %c16 = arith.constant 16 : index
    %c0_24 = arith.constant 0 : index
    %95 = vector.load %arg11[%c16, %c0_24] : memref<64x32xf32, #tpu.memory_space<vmem>>, vector<8x32xf32>
    tpu.vector_store %arg11[%c16, %c0_24], %94 {strides = array<i32>} : memref<64x32xf32, #tpu.memory_space<vmem>>, vector<8x32xf32>,
    %96 = vector.extract_strided_slice %6 {offsets = [24, 0], sizes = [8, 128], strides = [1, 1]} : vector<64x128xf32> to vector<8x128xf32>
    %cst_25 = arith.constant dense<0.000000e+00> : vector<8x128xf32>
    %97 = tpu.matmul %94, %2, %cst_25 {dimension_numbers = #tpu.dot_dimension_numbers<[1], [0], [0], [1], [0, 0, 1, 1], [], []>} : vector<8x32xf32>, vector<32x128xf32>, vector<8x128xf32> -> vector<8x128xf32>
    %98 = arith.addf %96, %97 : vector<8x128xf32>
    %99 = vector.extract_strided_slice %98 {offsets = [0, 0], sizes = [8, 32], strides = [1, 1]} : vector<8x128xf32> to vector<8x32xf32>
    %100 = arith.negf %99 : vector<8x32xf32>
    %101 = math.exp %100 : vector<8x32xf32>
    %cst_26 = arith.constant 1.000000e+00 : f32
    %102 = vector.broadcast %cst_26 : f32 to vector<8x32xf32>
    %103 = arith.addf %102, %101 : vector<8x32xf32>
    %104 = arith.divf %102, %103 : vector<8x32xf32>
    %105 = vector.extract_strided_slice %98 {offsets = [0, 32], sizes = [8, 32], strides = [1, 1]} : vector<8x128xf32> to vector<8x32xf32>
    %106 = arith.negf %105 : vector<8x32xf32>
    %107 = math.exp %106 : vector<8x32xf32>
    %cst_27 = arith.constant 1.000000e+00 : f32
    %108 = vector.broadcast %cst_27 : f32 to vector<8x32xf32>
    %109 = arith.addf %108, %107 : vector<8x32xf32>
    %110 = arith.divf %108, %109 : vector<8x32xf32>
    %111 = vector.extract_strided_slice %98 {offsets = [0, 64], sizes = [8, 32], strides = [1, 1]} : vector<8x128xf32> to vector<8x32xf32>
    %112 = math.tanh %111 : vector<8x32xf32>
    %113 = vector.extract_strided_slice %98 {offsets = [0, 96], sizes = [8, 32], strides = [1, 1]} : vector<8x128xf32> to vector<8x32xf32>
    %114 = arith.negf %113 : vector<8x32xf32>
    %115 = math.exp %114 : vector<8x32xf32>
    %cst_28 = arith.constant 1.000000e+00 : f32
    %116 = vector.broadcast %cst_28 : f32 to vector<8x32xf32>
    %117 = arith.addf %116, %115 : vector<8x32xf32>
    %118 = arith.divf %116, %117 : vector<8x32xf32>
    %119 = arith.mulf %110, %92 : vector<8x32xf32>
    %120 = arith.mulf %104, %112 : vector<8x32xf32>
    %121 = arith.addf %119, %120 : vector<8x32xf32>
    %122 = math.tanh %121 : vector<8x32xf32>
    %123 = arith.mulf %118, %122 : vector<8x32xf32>
    %c24 = arith.constant 24 : index
    %c0_29 = arith.constant 0 : index
    %124 = vector.load %arg11[%c24, %c0_29] : memref<64x32xf32, #tpu.memory_space<vmem>>, vector<8x32xf32>
    tpu.vector_store %arg11[%c24, %c0_29], %123 {strides = array<i32>} : memref<64x32xf32, #tpu.memory_space<vmem>>, vector<8x32xf32>,
    %125 = vector.extract_strided_slice %6 {offsets = [32, 0], sizes = [8, 128], strides = [1, 1]} : vector<64x128xf32> to vector<8x128xf32>
    %cst_30 = arith.constant dense<0.000000e+00> : vector<8x128xf32>
    %126 = tpu.matmul %123, %2, %cst_30 {dimension_numbers = #tpu.dot_dimension_numbers<[1], [0], [0], [1], [0, 0, 1, 1], [], []>} : vector<8x32xf32>, vector<32x128xf32>, vector<8x128xf32> -> vector<8x128xf32>
    %127 = arith.addf %125, %126 : vector<8x128xf32>
    %128 = vector.extract_strided_slice %127 {offsets = [0, 0], sizes = [8, 32], strides = [1, 1]} : vector<8x128xf32> to vector<8x32xf32>
    %129 = arith.negf %128 : vector<8x32xf32>
    %130 = math.exp %129 : vector<8x32xf32>
    %cst_31 = arith.constant 1.000000e+00 : f32
    %131 = vector.broadcast %cst_31 : f32 to vector<8x32xf32>
    %132 = arith.addf %131, %130 : vector<8x32xf32>
    %133 = arith.divf %131, %132 : vector<8x32xf32>
    %134 = vector.extract_strided_slice %127 {offsets = [0, 32], sizes = [8, 32], strides = [1, 1]} : vector<8x128xf32> to vector<8x32xf32>
    %135 = arith.negf %134 : vector<8x32xf32>
    %136 = math.exp %135 : vector<8x32xf32>
    %cst_32 = arith.constant 1.000000e+00 : f32
    %137 = vector.broadcast %cst_32 : f32 to vector<8x32xf32>
    %138 = arith.addf %137, %136 : vector<8x32xf32>
    %139 = arith.divf %137, %138 : vector<8x32xf32>
    %140 = vector.extract_strided_slice %127 {offsets = [0, 64], sizes = [8, 32], strides = [1, 1]} : vector<8x128xf32> to vector<8x32xf32>
    %141 = math.tanh %140 : vector<8x32xf32>
    %142 = vector.extract_strided_slice %127 {offsets = [0, 96], sizes = [8, 32], strides = [1, 1]} : vector<8x128xf32> to vector<8x32xf32>
    %143 = arith.negf %142 : vector<8x32xf32>
    %144 = math.exp %143 : vector<8x32xf32>
    %cst_33 = arith.constant 1.000000e+00 : f32
    %145 = vector.broadcast %cst_33 : f32 to vector<8x32xf32>
    %146 = arith.addf %145, %144 : vector<8x32xf32>
    %147 = arith.divf %145, %146 : vector<8x32xf32>
    %148 = arith.mulf %139, %121 : vector<8x32xf32>
    %149 = arith.mulf %133, %141 : vector<8x32xf32>
    %150 = arith.addf %148, %149 : vector<8x32xf32>
    %151 = math.tanh %150 : vector<8x32xf32>
    %152 = arith.mulf %147, %151 : vector<8x32xf32>
    %c32 = arith.constant 32 : index
    %c0_34 = arith.constant 0 : index
    %153 = vector.load %arg11[%c32, %c0_34] : memref<64x32xf32, #tpu.memory_space<vmem>>, vector<8x32xf32>
    tpu.vector_store %arg11[%c32, %c0_34], %152 {strides = array<i32>} : memref<64x32xf32, #tpu.memory_space<vmem>>, vector<8x32xf32>,
    %154 = vector.extract_strided_slice %6 {offsets = [40, 0], sizes = [8, 128], strides = [1, 1]} : vector<64x128xf32> to vector<8x128xf32>
    %cst_35 = arith.constant dense<0.000000e+00> : vector<8x128xf32>
    %155 = tpu.matmul %152, %2, %cst_35 {dimension_numbers = #tpu.dot_dimension_numbers<[1], [0], [0], [1], [0, 0, 1, 1], [], []>} : vector<8x32xf32>, vector<32x128xf32>, vector<8x128xf32> -> vector<8x128xf32>
    %156 = arith.addf %154, %155 : vector<8x128xf32>
    %157 = vector.extract_strided_slice %156 {offsets = [0, 0], sizes = [8, 32], strides = [1, 1]} : vector<8x128xf32> to vector<8x32xf32>
    %158 = arith.negf %157 : vector<8x32xf32>
    %159 = math.exp %158 : vector<8x32xf32>
    %cst_36 = arith.constant 1.000000e+00 : f32
    %160 = vector.broadcast %cst_36 : f32 to vector<8x32xf32>
    %161 = arith.addf %160, %159 : vector<8x32xf32>
    %162 = arith.divf %160, %161 : vector<8x32xf32>
    %163 = vector.extract_strided_slice %156 {offsets = [0, 32], sizes = [8, 32], strides = [1, 1]} : vector<8x128xf32> to vector<8x32xf32>
    %164 = arith.negf %163 : vector<8x32xf32>
    %165 = math.exp %164 : vector<8x32xf32>
    %cst_37 = arith.constant 1.000000e+00 : f32
    %166 = vector.broadcast %cst_37 : f32 to vector<8x32xf32>
    %167 = arith.addf %166, %165 : vector<8x32xf32>
    %168 = arith.divf %166, %167 : vector<8x32xf32>
    %169 = vector.extract_strided_slice %156 {offsets = [0, 64], sizes = [8, 32], strides = [1, 1]} : vector<8x128xf32> to vector<8x32xf32>
    %170 = math.tanh %169 : vector<8x32xf32>
    %171 = vector.extract_strided_slice %156 {offsets = [0, 96], sizes = [8, 32], strides = [1, 1]} : vector<8x128xf32> to vector<8x32xf32>
    %172 = arith.negf %171 : vector<8x32xf32>
    %173 = math.exp %172 : vector<8x32xf32>
    %cst_38 = arith.constant 1.000000e+00 : f32
    %174 = vector.broadcast %cst_38 : f32 to vector<8x32xf32>
    %175 = arith.addf %174, %173 : vector<8x32xf32>
    %176 = arith.divf %174, %175 : vector<8x32xf32>
    %177 = arith.mulf %168, %150 : vector<8x32xf32>
    %178 = arith.mulf %162, %170 : vector<8x32xf32>
    %179 = arith.addf %177, %178 : vector<8x32xf32>
    %180 = math.tanh %179 : vector<8x32xf32>
    %181 = arith.mulf %176, %180 : vector<8x32xf32>
    %c40 = arith.constant 40 : index
    %c0_39 = arith.constant 0 : index
    %182 = vector.load %arg11[%c40, %c0_39] : memref<64x32xf32, #tpu.memory_space<vmem>>, vector<8x32xf32>
    tpu.vector_store %arg11[%c40, %c0_39], %181 {strides = array<i32>} : memref<64x32xf32, #tpu.memory_space<vmem>>, vector<8x32xf32>,
    %183 = vector.extract_strided_slice %6 {offsets = [48, 0], sizes = [8, 128], strides = [1, 1]} : vector<64x128xf32> to vector<8x128xf32>
    %cst_40 = arith.constant dense<0.000000e+00> : vector<8x128xf32>
    %184 = tpu.matmul %181, %2, %cst_40 {dimension_numbers = #tpu.dot_dimension_numbers<[1], [0], [0], [1], [0, 0, 1, 1], [], []>} : vector<8x32xf32>, vector<32x128xf32>, vector<8x128xf32> -> vector<8x128xf32>
    %185 = arith.addf %183, %184 : vector<8x128xf32>
    %186 = vector.extract_strided_slice %185 {offsets = [0, 0], sizes = [8, 32], strides = [1, 1]} : vector<8x128xf32> to vector<8x32xf32>
    %187 = arith.negf %186 : vector<8x32xf32>
    %188 = math.exp %187 : vector<8x32xf32>
    %cst_41 = arith.constant 1.000000e+00 : f32
    %189 = vector.broadcast %cst_41 : f32 to vector<8x32xf32>
    %190 = arith.addf %189, %188 : vector<8x32xf32>
    %191 = arith.divf %189, %190 : vector<8x32xf32>
    %192 = vector.extract_strided_slice %185 {offsets = [0, 32], sizes = [8, 32], strides = [1, 1]} : vector<8x128xf32> to vector<8x32xf32>
    %193 = arith.negf %192 : vector<8x32xf32>
    %194 = math.exp %193 : vector<8x32xf32>
    %cst_42 = arith.constant 1.000000e+00 : f32
    %195 = vector.broadcast %cst_42 : f32 to vector<8x32xf32>
    %196 = arith.addf %195, %194 : vector<8x32xf32>
    %197 = arith.divf %195, %196 : vector<8x32xf32>
    %198 = vector.extract_strided_slice %185 {offsets = [0, 64], sizes = [8, 32], strides = [1, 1]} : vector<8x128xf32> to vector<8x32xf32>
    %199 = math.tanh %198 : vector<8x32xf32>
    %200 = vector.extract_strided_slice %185 {offsets = [0, 96], sizes = [8, 32], strides = [1, 1]} : vector<8x128xf32> to vector<8x32xf32>
    %201 = arith.negf %200 : vector<8x32xf32>
    %202 = math.exp %201 : vector<8x32xf32>
    %cst_43 = arith.constant 1.000000e+00 : f32
    %203 = vector.broadcast %cst_43 : f32 to vector<8x32xf32>
    %204 = arith.addf %203, %202 : vector<8x32xf32>
    %205 = arith.divf %203, %204 : vector<8x32xf32>
    %206 = arith.mulf %197, %179 : vector<8x32xf32>
    %207 = arith.mulf %191, %199 : vector<8x32xf32>
    %208 = arith.addf %206, %207 : vector<8x32xf32>
    %209 = math.tanh %208 : vector<8x32xf32>
    %210 = arith.mulf %205, %209 : vector<8x32xf32>
    %c48 = arith.constant 48 : index
    %c0_44 = arith.constant 0 : index
    %211 = vector.load %arg11[%c48, %c0_44] : memref<64x32xf32, #tpu.memory_space<vmem>>, vector<8x32xf32>
    tpu.vector_store %arg11[%c48, %c0_44], %210 {strides = array<i32>} : memref<64x32xf32, #tpu.memory_space<vmem>>, vector<8x32xf32>,
    %212 = vector.extract_strided_slice %6 {offsets = [56, 0], sizes = [8, 128], strides = [1, 1]} : vector<64x128xf32> to vector<8x128xf32>
    %cst_45 = arith.constant dense<0.000000e+00> : vector<8x128xf32>
    %213 = tpu.matmul %210, %2, %cst_45 {dimension_numbers = #tpu.dot_dimension_numbers<[1], [0], [0], [1], [0, 0, 1, 1], [], []>} : vector<8x32xf32>, vector<32x128xf32>, vector<8x128xf32> -> vector<8x128xf32>
    %214 = arith.addf %212, %213 : vector<8x128xf32>
    %215 = vector.extract_strided_slice %214 {offsets = [0, 0], sizes = [8, 32], strides = [1, 1]} : vector<8x128xf32> to vector<8x32xf32>
    %216 = arith.negf %215 : vector<8x32xf32>
    %217 = math.exp %216 : vector<8x32xf32>
    %cst_46 = arith.constant 1.000000e+00 : f32
    %218 = vector.broadcast %cst_46 : f32 to vector<8x32xf32>
    %219 = arith.addf %218, %217 : vector<8x32xf32>
    %220 = arith.divf %218, %219 : vector<8x32xf32>
    %221 = vector.extract_strided_slice %214 {offsets = [0, 32], sizes = [8, 32], strides = [1, 1]} : vector<8x128xf32> to vector<8x32xf32>
    %222 = arith.negf %221 : vector<8x32xf32>
    %223 = math.exp %222 : vector<8x32xf32>
    %cst_47 = arith.constant 1.000000e+00 : f32
    %224 = vector.broadcast %cst_47 : f32 to vector<8x32xf32>
    %225 = arith.addf %224, %223 : vector<8x32xf32>
    %226 = arith.divf %224, %225 : vector<8x32xf32>
    %227 = vector.extract_strided_slice %214 {offsets = [0, 64], sizes = [8, 32], strides = [1, 1]} : vector<8x128xf32> to vector<8x32xf32>
    %228 = math.tanh %227 : vector<8x32xf32>
    %229 = vector.extract_strided_slice %214 {offsets = [0, 96], sizes = [8, 32], strides = [1, 1]} : vector<8x128xf32> to vector<8x32xf32>
    %230 = arith.negf %229 : vector<8x32xf32>
    %231 = math.exp %230 : vector<8x32xf32>
    %cst_48 = arith.constant 1.000000e+00 : f32
    %232 = vector.broadcast %cst_48 : f32 to vector<8x32xf32>
    %233 = arith.addf %232, %231 : vector<8x32xf32>
    %234 = arith.divf %232, %233 : vector<8x32xf32>
    %235 = arith.mulf %226, %208 : vector<8x32xf32>
    %236 = arith.mulf %220, %228 : vector<8x32xf32>
    %237 = arith.addf %235, %236 : vector<8x32xf32>
    %238 = math.tanh %237 : vector<8x32xf32>
    %239 = arith.mulf %234, %238 : vector<8x32xf32>
    %c56 = arith.constant 56 : index
    %c0_49 = arith.constant 0 : index
    %240 = vector.load %arg11[%c56, %c0_49] : memref<64x32xf32, #tpu.memory_space<vmem>>, vector<8x32xf32>
    tpu.vector_store %arg11[%c56, %c0_49], %239 {strides = array<i32>} : memref<64x32xf32, #tpu.memory_space<vmem>>, vector<8x32xf32>,
    %c0_50 = arith.constant 0 : index
    %c0_51 = arith.constant 0 : index
    %241 = vector.load %arg11[%c0_50, %c0_51] : memref<64x32xf32, #tpu.memory_space<vmem>>, vector<64x32xf32>
    %c0_52 = arith.constant 0 : index
    %c0_53 = arith.constant 0 : index
    %242 = vector.load %arg5[%c0_52, %c0_53] : memref<32x128xf32, #tpu.memory_space<vmem>>, vector<32x128xf32>
    %c0_54 = arith.constant 0 : index
    %c0_55 = arith.constant 0 : index
    %243 = vector.load %arg6[%c0_54, %c0_55] : memref<32x128xf32, #tpu.memory_space<vmem>>, vector<32x128xf32>
    %c0_56 = arith.constant 0 : index
    %c0_57 = arith.constant 0 : index
    %244 = vector.load %arg7[%c0_56, %c0_57] : memref<1x128xf32, #tpu.memory_space<vmem>>, vector<1x128xf32>
    %cst_58 = arith.constant dense<0.000000e+00> : vector<64x128xf32>
    %245 = tpu.matmul %241, %242, %cst_58 {dimension_numbers = #tpu.dot_dimension_numbers<[1], [0], [0], [1], [0, 0, 1, 1], [], []>} : vector<64x32xf32>, vector<32x128xf32>, vector<64x128xf32> -> vector<64x128xf32>
    %246 = vector.broadcast %244 : vector<1x128xf32> to vector<64x128xf32>
    %247 = arith.addf %245, %246 : vector<64x128xf32>
    %cst_59 = arith.constant 0.000000e+00 : f32
    %248 = vector.broadcast %cst_59 : f32 to vector<8x32xf32>
    %cst_60 = arith.constant 0.000000e+00 : f32
    %249 = vector.broadcast %cst_60 : f32 to vector<8x32xf32>
    %250 = vector.extract_strided_slice %247 {offsets = [0, 0], sizes = [8, 128], strides = [1, 1]} : vector<64x128xf32> to vector<8x128xf32>
    %cst_61 = arith.constant dense<0.000000e+00> : vector<8x128xf32>
    %251 = tpu.matmul %248, %243, %cst_61 {dimension_numbers = #tpu.dot_dimension_numbers<[1], [0], [0], [1], [0, 0, 1, 1], [], []>} : vector<8x32xf32>, vector<32x128xf32>, vector<8x128xf32> -> vector<8x128xf32>
    %252 = arith.addf %250, %251 : vector<8x128xf32>
    %253 = vector.extract_strided_slice %252 {offsets = [0, 0], sizes = [8, 32], strides = [1, 1]} : vector<8x128xf32> to vector<8x32xf32>
    %254 = arith.negf %253 : vector<8x32xf32>
    %255 = math.exp %254 : vector<8x32xf32>
    %cst_62 = arith.constant 1.000000e+00 : f32
    %256 = vector.broadcast %cst_62 : f32 to vector<8x32xf32>
    %257 = arith.addf %256, %255 : vector<8x32xf32>
    %258 = arith.divf %256, %257 : vector<8x32xf32>
    %259 = vector.extract_strided_slice %252 {offsets = [0, 32], sizes = [8, 32], strides = [1, 1]} : vector<8x128xf32> to vector<8x32xf32>
    %260 = arith.negf %259 : vector<8x32xf32>
    %261 = math.exp %260 : vector<8x32xf32>
    %cst_63 = arith.constant 1.000000e+00 : f32
    %262 = vector.broadcast %cst_63 : f32 to vector<8x32xf32>
    %263 = arith.addf %262, %261 : vector<8x32xf32>
    %264 = arith.divf %262, %263 : vector<8x32xf32>
    %265 = vector.extract_strided_slice %252 {offsets = [0, 64], sizes = [8, 32], strides = [1, 1]} : vector<8x128xf32> to vector<8x32xf32>
    %266 = math.tanh %265 : vector<8x32xf32>
    %267 = vector.extract_strided_slice %252 {offsets = [0, 96], sizes = [8, 32], strides = [1, 1]} : vector<8x128xf32> to vector<8x32xf32>
    %268 = arith.negf %267 : vector<8x32xf32>
    %269 = math.exp %268 : vector<8x32xf32>
    %cst_64 = arith.constant 1.000000e+00 : f32
    %270 = vector.broadcast %cst_64 : f32 to vector<8x32xf32>
    %271 = arith.addf %270, %269 : vector<8x32xf32>
    %272 = arith.divf %270, %271 : vector<8x32xf32>
    %273 = arith.mulf %264, %249 : vector<8x32xf32>
    %274 = arith.mulf %258, %266 : vector<8x32xf32>
    %275 = arith.addf %273, %274 : vector<8x32xf32>
    %276 = math.tanh %275 : vector<8x32xf32>
    %277 = arith.mulf %272, %276 : vector<8x32xf32>
    %278 = vector.extract_strided_slice %247 {offsets = [8, 0], sizes = [8, 128], strides = [1, 1]} : vector<64x128xf32> to vector<8x128xf32>
    %cst_65 = arith.constant dense<0.000000e+00> : vector<8x128xf32>
    %279 = tpu.matmul %277, %243, %cst_65 {dimension_numbers = #tpu.dot_dimension_numbers<[1], [0], [0], [1], [0, 0, 1, 1], [], []>} : vector<8x32xf32>, vector<32x128xf32>, vector<8x128xf32> -> vector<8x128xf32>
    %280 = arith.addf %278, %279 : vector<8x128xf32>
    %281 = vector.extract_strided_slice %280 {offsets = [0, 0], sizes = [8, 32], strides = [1, 1]} : vector<8x128xf32> to vector<8x32xf32>
    %282 = arith.negf %281 : vector<8x32xf32>
    %283 = math.exp %282 : vector<8x32xf32>
    %cst_66 = arith.constant 1.000000e+00 : f32
    %284 = vector.broadcast %cst_66 : f32 to vector<8x32xf32>
    %285 = arith.addf %284, %283 : vector<8x32xf32>
    %286 = arith.divf %284, %285 : vector<8x32xf32>
    %287 = vector.extract_strided_slice %280 {offsets = [0, 32], sizes = [8, 32], strides = [1, 1]} : vector<8x128xf32> to vector<8x32xf32>
    %288 = arith.negf %287 : vector<8x32xf32>
    %289 = math.exp %288 : vector<8x32xf32>
    %cst_67 = arith.constant 1.000000e+00 : f32
    %290 = vector.broadcast %cst_67 : f32 to vector<8x32xf32>
    %291 = arith.addf %290, %289 : vector<8x32xf32>
    %292 = arith.divf %290, %291 : vector<8x32xf32>
    %293 = vector.extract_strided_slice %280 {offsets = [0, 64], sizes = [8, 32], strides = [1, 1]} : vector<8x128xf32> to vector<8x32xf32>
    %294 = math.tanh %293 : vector<8x32xf32>
    %295 = vector.extract_strided_slice %280 {offsets = [0, 96], sizes = [8, 32], strides = [1, 1]} : vector<8x128xf32> to vector<8x32xf32>
    %296 = arith.negf %295 : vector<8x32xf32>
    %297 = math.exp %296 : vector<8x32xf32>
    %cst_68 = arith.constant 1.000000e+00 : f32
    %298 = vector.broadcast %cst_68 : f32 to vector<8x32xf32>
    %299 = arith.addf %298, %297 : vector<8x32xf32>
    %300 = arith.divf %298, %299 : vector<8x32xf32>
    %301 = arith.mulf %292, %275 : vector<8x32xf32>
    %302 = arith.mulf %286, %294 : vector<8x32xf32>
    %303 = arith.addf %301, %302 : vector<8x32xf32>
    %304 = math.tanh %303 : vector<8x32xf32>
    %305 = arith.mulf %300, %304 : vector<8x32xf32>
    %306 = vector.extract_strided_slice %247 {offsets = [16, 0], sizes = [8, 128], strides = [1, 1]} : vector<64x128xf32> to vector<8x128xf32>
    %cst_69 = arith.constant dense<0.000000e+00> : vector<8x128xf32>
    %307 = tpu.matmul %305, %243, %cst_69 {dimension_numbers = #tpu.dot_dimension_numbers<[1], [0], [0], [1], [0, 0, 1, 1], [], []>} : vector<8x32xf32>, vector<32x128xf32>, vector<8x128xf32> -> vector<8x128xf32>
    %308 = arith.addf %306, %307 : vector<8x128xf32>
    %309 = vector.extract_strided_slice %308 {offsets = [0, 0], sizes = [8, 32], strides = [1, 1]} : vector<8x128xf32> to vector<8x32xf32>
    %310 = arith.negf %309 : vector<8x32xf32>
    %311 = math.exp %310 : vector<8x32xf32>
    %cst_70 = arith.constant 1.000000e+00 : f32
    %312 = vector.broadcast %cst_70 : f32 to vector<8x32xf32>
    %313 = arith.addf %312, %311 : vector<8x32xf32>
    %314 = arith.divf %312, %313 : vector<8x32xf32>
    %315 = vector.extract_strided_slice %308 {offsets = [0, 32], sizes = [8, 32], strides = [1, 1]} : vector<8x128xf32> to vector<8x32xf32>
    %316 = arith.negf %315 : vector<8x32xf32>
    %317 = math.exp %316 : vector<8x32xf32>
    %cst_71 = arith.constant 1.000000e+00 : f32
    %318 = vector.broadcast %cst_71 : f32 to vector<8x32xf32>
    %319 = arith.addf %318, %317 : vector<8x32xf32>
    %320 = arith.divf %318, %319 : vector<8x32xf32>
    %321 = vector.extract_strided_slice %308 {offsets = [0, 64], sizes = [8, 32], strides = [1, 1]} : vector<8x128xf32> to vector<8x32xf32>
    %322 = math.tanh %321 : vector<8x32xf32>
    %323 = vector.extract_strided_slice %308 {offsets = [0, 96], sizes = [8, 32], strides = [1, 1]} : vector<8x128xf32> to vector<8x32xf32>
    %324 = arith.negf %323 : vector<8x32xf32>
    %325 = math.exp %324 : vector<8x32xf32>
    %cst_72 = arith.constant 1.000000e+00 : f32
    %326 = vector.broadcast %cst_72 : f32 to vector<8x32xf32>
    %327 = arith.addf %326, %325 : vector<8x32xf32>
    %328 = arith.divf %326, %327 : vector<8x32xf32>
    %329 = arith.mulf %320, %303 : vector<8x32xf32>
    %330 = arith.mulf %314, %322 : vector<8x32xf32>
    %331 = arith.addf %329, %330 : vector<8x32xf32>
    %332 = math.tanh %331 : vector<8x32xf32>
    %333 = arith.mulf %328, %332 : vector<8x32xf32>
    %334 = vector.extract_strided_slice %247 {offsets = [24, 0], sizes = [8, 128], strides = [1, 1]} : vector<64x128xf32> to vector<8x128xf32>
    %cst_73 = arith.constant dense<0.000000e+00> : vector<8x128xf32>
    %335 = tpu.matmul %333, %243, %cst_73 {dimension_numbers = #tpu.dot_dimension_numbers<[1], [0], [0], [1], [0, 0, 1, 1], [], []>} : vector<8x32xf32>, vector<32x128xf32>, vector<8x128xf32> -> vector<8x128xf32>
    %336 = arith.addf %334, %335 : vector<8x128xf32>
    %337 = vector.extract_strided_slice %336 {offsets = [0, 0], sizes = [8, 32], strides = [1, 1]} : vector<8x128xf32> to vector<8x32xf32>
    %338 = arith.negf %337 : vector<8x32xf32>
    %339 = math.exp %338 : vector<8x32xf32>
    %cst_74 = arith.constant 1.000000e+00 : f32
    %340 = vector.broadcast %cst_74 : f32 to vector<8x32xf32>
    %341 = arith.addf %340, %339 : vector<8x32xf32>
    %342 = arith.divf %340, %341 : vector<8x32xf32>
    %343 = vector.extract_strided_slice %336 {offsets = [0, 32], sizes = [8, 32], strides = [1, 1]} : vector<8x128xf32> to vector<8x32xf32>
    %344 = arith.negf %343 : vector<8x32xf32>
    %345 = math.exp %344 : vector<8x32xf32>
    %cst_75 = arith.constant 1.000000e+00 : f32
    %346 = vector.broadcast %cst_75 : f32 to vector<8x32xf32>
    %347 = arith.addf %346, %345 : vector<8x32xf32>
    %348 = arith.divf %346, %347 : vector<8x32xf32>
    %349 = vector.extract_strided_slice %336 {offsets = [0, 64], sizes = [8, 32], strides = [1, 1]} : vector<8x128xf32> to vector<8x32xf32>
    %350 = math.tanh %349 : vector<8x32xf32>
    %351 = vector.extract_strided_slice %336 {offsets = [0, 96], sizes = [8, 32], strides = [1, 1]} : vector<8x128xf32> to vector<8x32xf32>
    %352 = arith.negf %351 : vector<8x32xf32>
    %353 = math.exp %352 : vector<8x32xf32>
    %cst_76 = arith.constant 1.000000e+00 : f32
    %354 = vector.broadcast %cst_76 : f32 to vector<8x32xf32>
    %355 = arith.addf %354, %353 : vector<8x32xf32>
    %356 = arith.divf %354, %355 : vector<8x32xf32>
    %357 = arith.mulf %348, %331 : vector<8x32xf32>
    %358 = arith.mulf %342, %350 : vector<8x32xf32>
    %359 = arith.addf %357, %358 : vector<8x32xf32>
    %360 = math.tanh %359 : vector<8x32xf32>
    %361 = arith.mulf %356, %360 : vector<8x32xf32>
    %362 = vector.extract_strided_slice %247 {offsets = [32, 0], sizes = [8, 128], strides = [1, 1]} : vector<64x128xf32> to vector<8x128xf32>
    %cst_77 = arith.constant dense<0.000000e+00> : vector<8x128xf32>
    %363 = tpu.matmul %361, %243, %cst_77 {dimension_numbers = #tpu.dot_dimension_numbers<[1], [0], [0], [1], [0, 0, 1, 1], [], []>} : vector<8x32xf32>, vector<32x128xf32>, vector<8x128xf32> -> vector<8x128xf32>
    %364 = arith.addf %362, %363 : vector<8x128xf32>
    %365 = vector.extract_strided_slice %364 {offsets = [0, 0], sizes = [8, 32], strides = [1, 1]} : vector<8x128xf32> to vector<8x32xf32>
    %366 = arith.negf %365 : vector<8x32xf32>
    %367 = math.exp %366 : vector<8x32xf32>
    %cst_78 = arith.constant 1.000000e+00 : f32
    %368 = vector.broadcast %cst_78 : f32 to vector<8x32xf32>
    %369 = arith.addf %368, %367 : vector<8x32xf32>
    %370 = arith.divf %368, %369 : vector<8x32xf32>
    %371 = vector.extract_strided_slice %364 {offsets = [0, 32], sizes = [8, 32], strides = [1, 1]} : vector<8x128xf32> to vector<8x32xf32>
    %372 = arith.negf %371 : vector<8x32xf32>
    %373 = math.exp %372 : vector<8x32xf32>
    %cst_79 = arith.constant 1.000000e+00 : f32
    %374 = vector.broadcast %cst_79 : f32 to vector<8x32xf32>
    %375 = arith.addf %374, %373 : vector<8x32xf32>
    %376 = arith.divf %374, %375 : vector<8x32xf32>
    %377 = vector.extract_strided_slice %364 {offsets = [0, 64], sizes = [8, 32], strides = [1, 1]} : vector<8x128xf32> to vector<8x32xf32>
    %378 = math.tanh %377 : vector<8x32xf32>
    %379 = vector.extract_strided_slice %364 {offsets = [0, 96], sizes = [8, 32], strides = [1, 1]} : vector<8x128xf32> to vector<8x32xf32>
    %380 = arith.negf %379 : vector<8x32xf32>
    %381 = math.exp %380 : vector<8x32xf32>
    %cst_80 = arith.constant 1.000000e+00 : f32
    %382 = vector.broadcast %cst_80 : f32 to vector<8x32xf32>
    %383 = arith.addf %382, %381 : vector<8x32xf32>
    %384 = arith.divf %382, %383 : vector<8x32xf32>
    %385 = arith.mulf %376, %359 : vector<8x32xf32>
    %386 = arith.mulf %370, %378 : vector<8x32xf32>
    %387 = arith.addf %385, %386 : vector<8x32xf32>
    %388 = math.tanh %387 : vector<8x32xf32>
    %389 = arith.mulf %384, %388 : vector<8x32xf32>
    %390 = vector.extract_strided_slice %247 {offsets = [40, 0], sizes = [8, 128], strides = [1, 1]} : vector<64x128xf32> to vector<8x128xf32>
    %cst_81 = arith.constant dense<0.000000e+00> : vector<8x128xf32>
    %391 = tpu.matmul %389, %243, %cst_81 {dimension_numbers = #tpu.dot_dimension_numbers<[1], [0], [0], [1], [0, 0, 1, 1], [], []>} : vector<8x32xf32>, vector<32x128xf32>, vector<8x128xf32> -> vector<8x128xf32>
    %392 = arith.addf %390, %391 : vector<8x128xf32>
    %393 = vector.extract_strided_slice %392 {offsets = [0, 0], sizes = [8, 32], strides = [1, 1]} : vector<8x128xf32> to vector<8x32xf32>
    %394 = arith.negf %393 : vector<8x32xf32>
    %395 = math.exp %394 : vector<8x32xf32>
    %cst_82 = arith.constant 1.000000e+00 : f32
    %396 = vector.broadcast %cst_82 : f32 to vector<8x32xf32>
    %397 = arith.addf %396, %395 : vector<8x32xf32>
    %398 = arith.divf %396, %397 : vector<8x32xf32>
    %399 = vector.extract_strided_slice %392 {offsets = [0, 32], sizes = [8, 32], strides = [1, 1]} : vector<8x128xf32> to vector<8x32xf32>
    %400 = arith.negf %399 : vector<8x32xf32>
    %401 = math.exp %400 : vector<8x32xf32>
    %cst_83 = arith.constant 1.000000e+00 : f32
    %402 = vector.broadcast %cst_83 : f32 to vector<8x32xf32>
    %403 = arith.addf %402, %401 : vector<8x32xf32>
    %404 = arith.divf %402, %403 : vector<8x32xf32>
    %405 = vector.extract_strided_slice %392 {offsets = [0, 64], sizes = [8, 32], strides = [1, 1]} : vector<8x128xf32> to vector<8x32xf32>
    %406 = math.tanh %405 : vector<8x32xf32>
    %407 = vector.extract_strided_slice %392 {offsets = [0, 96], sizes = [8, 32], strides = [1, 1]} : vector<8x128xf32> to vector<8x32xf32>
    %408 = arith.negf %407 : vector<8x32xf32>
    %409 = math.exp %408 : vector<8x32xf32>
    %cst_84 = arith.constant 1.000000e+00 : f32
    %410 = vector.broadcast %cst_84 : f32 to vector<8x32xf32>
    %411 = arith.addf %410, %409 : vector<8x32xf32>
    %412 = arith.divf %410, %411 : vector<8x32xf32>
    %413 = arith.mulf %404, %387 : vector<8x32xf32>
    %414 = arith.mulf %398, %406 : vector<8x32xf32>
    %415 = arith.addf %413, %414 : vector<8x32xf32>
    %416 = math.tanh %415 : vector<8x32xf32>
    %417 = arith.mulf %412, %416 : vector<8x32xf32>
    %418 = vector.extract_strided_slice %247 {offsets = [48, 0], sizes = [8, 128], strides = [1, 1]} : vector<64x128xf32> to vector<8x128xf32>
    %cst_85 = arith.constant dense<0.000000e+00> : vector<8x128xf32>
    %419 = tpu.matmul %417, %243, %cst_85 {dimension_numbers = #tpu.dot_dimension_numbers<[1], [0], [0], [1], [0, 0, 1, 1], [], []>} : vector<8x32xf32>, vector<32x128xf32>, vector<8x128xf32> -> vector<8x128xf32>
    %420 = arith.addf %418, %419 : vector<8x128xf32>
    %421 = vector.extract_strided_slice %420 {offsets = [0, 0], sizes = [8, 32], strides = [1, 1]} : vector<8x128xf32> to vector<8x32xf32>
    %422 = arith.negf %421 : vector<8x32xf32>
    %423 = math.exp %422 : vector<8x32xf32>
    %cst_86 = arith.constant 1.000000e+00 : f32
    %424 = vector.broadcast %cst_86 : f32 to vector<8x32xf32>
    %425 = arith.addf %424, %423 : vector<8x32xf32>
    %426 = arith.divf %424, %425 : vector<8x32xf32>
    %427 = vector.extract_strided_slice %420 {offsets = [0, 32], sizes = [8, 32], strides = [1, 1]} : vector<8x128xf32> to vector<8x32xf32>
    %428 = arith.negf %427 : vector<8x32xf32>
    %429 = math.exp %428 : vector<8x32xf32>
    %cst_87 = arith.constant 1.000000e+00 : f32
    %430 = vector.broadcast %cst_87 : f32 to vector<8x32xf32>
    %431 = arith.addf %430, %429 : vector<8x32xf32>
    %432 = arith.divf %430, %431 : vector<8x32xf32>
    %433 = vector.extract_strided_slice %420 {offsets = [0, 64], sizes = [8, 32], strides = [1, 1]} : vector<8x128xf32> to vector<8x32xf32>
    %434 = math.tanh %433 : vector<8x32xf32>
    %435 = vector.extract_strided_slice %420 {offsets = [0, 96], sizes = [8, 32], strides = [1, 1]} : vector<8x128xf32> to vector<8x32xf32>
    %436 = arith.negf %435 : vector<8x32xf32>
    %437 = math.exp %436 : vector<8x32xf32>
    %cst_88 = arith.constant 1.000000e+00 : f32
    %438 = vector.broadcast %cst_88 : f32 to vector<8x32xf32>
    %439 = arith.addf %438, %437 : vector<8x32xf32>
    %440 = arith.divf %438, %439 : vector<8x32xf32>
    %441 = arith.mulf %432, %415 : vector<8x32xf32>
    %442 = arith.mulf %426, %434 : vector<8x32xf32>
    %443 = arith.addf %441, %442 : vector<8x32xf32>
    %444 = math.tanh %443 : vector<8x32xf32>
    %445 = arith.mulf %440, %444 : vector<8x32xf32>
    %446 = vector.extract_strided_slice %247 {offsets = [56, 0], sizes = [8, 128], strides = [1, 1]} : vector<64x128xf32> to vector<8x128xf32>
    %cst_89 = arith.constant dense<0.000000e+00> : vector<8x128xf32>
    %447 = tpu.matmul %445, %243, %cst_89 {dimension_numbers = #tpu.dot_dimension_numbers<[1], [0], [0], [1], [0, 0, 1, 1], [], []>} : vector<8x32xf32>, vector<32x128xf32>, vector<8x128xf32> -> vector<8x128xf32>
    %448 = arith.addf %446, %447 : vector<8x128xf32>
    %449 = vector.extract_strided_slice %448 {offsets = [0, 0], sizes = [8, 32], strides = [1, 1]} : vector<8x128xf32> to vector<8x32xf32>
    %450 = arith.negf %449 : vector<8x32xf32>
    %451 = math.exp %450 : vector<8x32xf32>
    %cst_90 = arith.constant 1.000000e+00 : f32
    %452 = vector.broadcast %cst_90 : f32 to vector<8x32xf32>
    %453 = arith.addf %452, %451 : vector<8x32xf32>
    %454 = arith.divf %452, %453 : vector<8x32xf32>
    %455 = vector.extract_strided_slice %448 {offsets = [0, 32], sizes = [8, 32], strides = [1, 1]} : vector<8x128xf32> to vector<8x32xf32>
    %456 = arith.negf %455 : vector<8x32xf32>
    %457 = math.exp %456 : vector<8x32xf32>
    %cst_91 = arith.constant 1.000000e+00 : f32
    %458 = vector.broadcast %cst_91 : f32 to vector<8x32xf32>
    %459 = arith.addf %458, %457 : vector<8x32xf32>
    %460 = arith.divf %458, %459 : vector<8x32xf32>
    %461 = vector.extract_strided_slice %448 {offsets = [0, 64], sizes = [8, 32], strides = [1, 1]} : vector<8x128xf32> to vector<8x32xf32>
    %462 = math.tanh %461 : vector<8x32xf32>
    %463 = vector.extract_strided_slice %448 {offsets = [0, 96], sizes = [8, 32], strides = [1, 1]} : vector<8x128xf32> to vector<8x32xf32>
    %464 = arith.negf %463 : vector<8x32xf32>
    %465 = math.exp %464 : vector<8x32xf32>
    %cst_92 = arith.constant 1.000000e+00 : f32
    %466 = vector.broadcast %cst_92 : f32 to vector<8x32xf32>
    %467 = arith.addf %466, %465 : vector<8x32xf32>
    %468 = arith.divf %466, %467 : vector<8x32xf32>
    %469 = arith.mulf %460, %443 : vector<8x32xf32>
    %470 = arith.mulf %454, %462 : vector<8x32xf32>
    %471 = arith.addf %469, %470 : vector<8x32xf32>
    %472 = math.tanh %471 : vector<8x32xf32>
    %473 = arith.mulf %468, %472 : vector<8x32xf32>
    %c0_93 = arith.constant 0 : index
    %c0_94 = arith.constant 0 : index
    %474 = vector.load %arg8[%c0_93, %c0_94] : memref<1x32xf32, #tpu.memory_space<vmem>>, vector<1x32xf32>
    %475 = vector.broadcast %474 : vector<1x32xf32> to vector<8x32xf32>
    %476 = arith.mulf %473, %475 : vector<8x32xf32>
    %cst_95 = arith.constant dense<0.000000e+00> : vector<8xf32>
    %477 = vector.multi_reduction <add>, %476, %cst_95 [1] : vector<8x32xf32> to vector<8xf32>
    %478 = vector.shape_cast %477 : vector<8xf32> to vector<8x1xf32>
    %c0_96 = arith.constant 0 : index
    %c0_97 = arith.constant 0 : index
    %479 = vector.load %arg9[%c0_96, %c0_97] : memref<1x1xf32, #tpu.memory_space<vmem>>, vector<1x1xf32>
    %480 = vector.broadcast %479 : vector<1x1xf32> to vector<8x1xf32>
    %481 = arith.addf %478, %480 : vector<8x1xf32>
    %482 = math.exp %481 : vector<8x1xf32>
    %483 = vector.extract_strided_slice %482 {offsets = [0, 0], sizes = [2, 1], strides = [1, 1]} : vector<8x1xf32> to vector<2x1xf32>
    %484 = vector.extract_strided_slice %482 {offsets = [2, 0], sizes = [2, 1], strides = [1, 1]} : vector<8x1xf32> to vector<2x1xf32>
    %485 = arith.addf %483, %484 : vector<2x1xf32>
    %486 = arith.divf %483, %485 : vector<2x1xf32>
    %cst_98 = arith.constant 0.000000e+00 : f32
    %487 = vector.broadcast %cst_98 : f32 to vector<8x128xf32>
    %c0_99 = arith.constant 0 : index
    %c0_100 = arith.constant 0 : index
    %488 = vector.load %arg10[%c0_99, %c0_100] : memref<8x128xf32, #tpu.memory_space<vmem>>, vector<8x128xf32>
    tpu.vector_store %arg10[%c0_99, %c0_100], %487 {strides = array<i32>} : memref<8x128xf32, #tpu.memory_space<vmem>>, vector<8x128xf32>,
    %489 = vector.shape_cast %486 : vector<2x1xf32> to vector<2x1xf32>
    %490 = vector.broadcast %489 : vector<2x1xf32> to vector<2x128xf32>
    %c0_101 = arith.constant 0 : index
    %c0_102 = arith.constant 0 : index
    %491 = vector.load %arg10[%c0_101, %c0_102] : memref<8x128xf32, #tpu.memory_space<vmem>>, vector<2x128xf32>
    tpu.vector_store %arg10[%c0_101, %c0_102], %490 {strides = array<i32>} : memref<8x128xf32, #tpu.memory_space<vmem>>, vector<2x128xf32>,
    return
  }
  func.func @transform_0(%arg0: i32) -> (i32, i32) {
    %c0_i32 = arith.constant 0 : i32
    %c0_i32_0 = arith.constant 0 : i32
    %c0_i32_1 = arith.constant 0 : i32
    return %c0_i32, %c0_i32_0 : i32, i32
  }
  func.func @transform_1(%arg0: i32) -> (i32, i32) {
    %c0_i32 = arith.constant 0 : i32
    %c0_i32_0 = arith.constant 0 : i32
    %c0_i32_1 = arith.constant 0 : i32
    return %c0_i32, %c0_i32_0 : i32, i32
  }
  func.func @transform_2(%arg0: i32) -> (i32, i32) {
    %c0_i32 = arith.constant 0 : i32
    %c0_i32_0 = arith.constant 0 : i32
    %c0_i32_1 = arith.constant 0 : i32
    return %c0_i32, %c0_i32_0 : i32, i32
  }
  func.func @transform_3(%arg0: i32) -> (i32, i32) {
    %c0_i32 = arith.constant 0 : i32
    %c0_i32_0 = arith.constant 0 : i32
    %c0_i32_1 = arith.constant 0 : i32
    return %c0_i32, %c0_i32_0 : i32, i32
  }
  func.func @transform_4(%arg0: i32) -> (i32, i32) {
    %c0_i32 = arith.constant 0 : i32
    %c0_i32_0 = arith.constant 0 : i32
    %c0_i32_1 = arith.constant 0 : i32
    return %c0_i32, %c0_i32_0 : i32, i32
  }
  func.func @transform_5(%arg0: i32) -> (i32, i32) {
    %c0_i32 = arith.constant 0 : i32
    %c0_i32_0 = arith.constant 0 : i32
    %c0_i32_1 = arith.constant 0 : i32
    return %c0_i32, %c0_i32_0 : i32, i32
  }
  func.func @transform_6(%arg0: i32) -> (i32, i32) {
    %c0_i32 = arith.constant 0 : i32
    %c0_i32_0 = arith.constant 0 : i32
    %c0_i32_1 = arith.constant 0 : i32
    return %c0_i32, %c0_i32_0 : i32, i32
  }
  func.func @transform_7(%arg0: i32) -> (i32, i32) {
    %c0_i32 = arith.constant 0 : i32
    %c0_i32_0 = arith.constant 0 : i32
    %c0_i32_1 = arith.constant 0 : i32
    return %c0_i32, %c0_i32_0 : i32, i32
  }
  func.func @transform_8(%arg0: i32) -> (i32, i32) {
    %c0_i32 = arith.constant 0 : i32
    %c0_i32_0 = arith.constant 0 : i32
    %c0_i32_1 = arith.constant 0 : i32
    return %c0_i32, %c0_i32_0 : i32, i32
  }
  func.func @transform_9(%arg0: i32) -> (i32, i32) {
    %c0_i32 = arith.constant 0 : i32
    %c0_i32_0 = arith.constant 0 : i32
    %c0_i32_1 = arith.constant 0 : i32
    return %c0_i32, %c0_i32_0 : i32, i32
  }
}

</mosaic_0001>

<llo_original>
// kernel: lstm_model_forward.1
$region0: #{lstm_model_forward.1}
  #allocation0 [shape = 'u32[]', space=smem, size = 0x4, offset = 0x4, fixed_abs, tag = 'smem constant byte address 0x4 - core index']
  #allocation1 [shape = 'u32[72,128]{1,0:T(1,128)}', space=vmem, size = 0x9000, scoped, tag = 'internal scratch']
  #allocation2 [shape = 'f32[64,32]{1,0:T(8,128)}', space=vmem, size = 0x8000, scoped, tag = 'scratch operand']
  #allocation3 [shape = 'f32[1,1]{1,0:T(1,128)S(1)}', space=vmem, size = 0x200, scoped, tag = 'scoped memory for lstm_model_forward.1']
  %s0 = inlined_call_operand.vmem [shape: f32[64,32], index: 0, kind: input, shape index: {}]
  %s1 = inlined_call_operand.vmem [shape: f32[32,128], index: 1, kind: input, shape index: {}]
  %s2 = inlined_call_operand.vmem [shape: f32[32,128], index: 2, kind: input, shape index: {}]
  %s3 = inlined_call_operand.vmem [shape: f32[1,128], index: 3, kind: input, shape index: {}]
  %s4 = inlined_call_operand.vmem [shape: f32[32,128], index: 4, kind: input, shape index: {}]
  %s5 = inlined_call_operand.vmem [shape: f32[32,128], index: 5, kind: input, shape index: {}]
  %s6 = inlined_call_operand.vmem [shape: f32[1,128], index: 6, kind: input, shape index: {}]
  %s7 = inlined_call_operand.vmem [shape: f32[1,32], index: 7, kind: input, shape index: {}]
  %s8 = inlined_call_operand.<no memory space> [shape: f32[1,1], index: 8, kind: input, shape index: {}]
  %s9 = inlined_call_operand.vmem [shape: f32[8,128], index: 9, kind: output, shape index: {}]
  %s10 = sld [smem:[#allocation0]]
  $region46: #{lstm_model_forward.1} parent=0
    _
  %s12 = ssub.s32 1, %s10
  %s13 = scalar_select 0, %s12, %s10
  %v14 = vstv %s8
  %15 = vst [vmem:[#allocation3] sm:$0x1] %v14
  // Predicated region
  $region2: #{lstm_model_forward.1} parent=0 // pred_check
    _
  $region3: #{lstm_model_forward.1} parent=0 // pred_check_branch
    %17 = sbr.rel (0) target = $region5
  $region4: #{lstm_model_forward.1} parent=0 // pred_region
    _
  $region5: #{lstm_model_forward.1} parent=0 // pred_fallthru
    _
  // Predicated region
  $region6: #{lstm_model_forward.1} parent=0 // pred_check
    _
  $region7: #{lstm_model_forward.1} parent=0 // pred_check_branch
    %19 = sbr.rel (0) target = $region9
  $region8: #{lstm_model_forward.1} parent=0 // pred_region
    _
  $region9: #{lstm_model_forward.1} parent=0 // pred_fallthru
    _
  // Predicated region
  $region10: #{lstm_model_forward.1} parent=0 // pred_check
    _
  $region11: #{lstm_model_forward.1} parent=0 // pred_check_branch
    %21 = sbr.rel (0) target = $region13
  $region12: #{lstm_model_forward.1} parent=0 // pred_region
    _
  $region13: #{lstm_model_forward.1} parent=0 // pred_fallthru
    _
  // Predicated region
  $region14: #{lstm_model_forward.1} parent=0 // pred_check
    _
  $region15: #{lstm_model_forward.1} parent=0 // pred_check_branch
    %23 = sbr.rel (0) target = $region17
  $region16: #{lstm_model_forward.1} parent=0 // pred_region
    _
  $region17: #{lstm_model_forward.1} parent=0 // pred_fallthru
    _
  // Predicated region
  $region18: #{lstm_model_forward.1} parent=0 // pred_check
    _
  $region19: #{lstm_model_forward.1} parent=0 // pred_check_branch
    %25 = sbr.rel (0) target = $region21
  $region20: #{lstm_model_forward.1} parent=0 // pred_region
    _
  $region21: #{lstm_model_forward.1} parent=0 // pred_fallthru
    _
  // Predicated region
  $region22: #{lstm_model_forward.1} parent=0 // pred_check
    _
  $region23: #{lstm_model_forward.1} parent=0 // pred_check_branch
    %27 = sbr.rel (0) target = $region25
  $region24: #{lstm_model_forward.1} parent=0 // pred_region
    _
  $region25: #{lstm_model_forward.1} parent=0 // pred_fallthru
    _
  // Predicated region
  $region26: #{lstm_model_forward.1} parent=0 // pred_check
    _
  $region27: #{lstm_model_forward.1} parent=0 // pred_check_branch
    %29 = sbr.rel (0) target = $region29
  $region28: #{lstm_model_forward.1} parent=0 // pred_region
    _
  $region29: #{lstm_model_forward.1} parent=0 // pred_fallthru
    _
  // Predicated region
  $region30: #{lstm_model_forward.1} parent=0 // pred_check
    _
  $region31: #{lstm_model_forward.1} parent=0 // pred_check_branch
    %31 = sbr.rel (0) target = $region33
  $region32: #{lstm_model_forward.1} parent=0 // pred_region
    _
  $region33: #{lstm_model_forward.1} parent=0 // pred_fallthru
    _
  // Predicated region
  $region34: #{lstm_model_forward.1} parent=0 // pred_check
    _
  $region35: #{lstm_model_forward.1} parent=0 // pred_check_branch
    %33 = sbr.rel (0) target = $region37
  $region36: #{lstm_model_forward.1} parent=0 // pred_region
    _
  $region37: #{lstm_model_forward.1} parent=0 // pred_fallthru
    _
  %v34 = vld [vmem:[%s0] sm:$0xff]
  %v35 = vld [vmem:[%s0 + $0x8] sm:$0xff]
  %v36 = vld [vmem:[%s0 + $0x10] sm:$0xff]
  %v37 = vld [vmem:[%s0 + $0x18] sm:$0xff]
  %v38 = vld [vmem:[%s0 + $0x20] sm:$0xff]
  %v39 = vld [vmem:[%s0 + $0x28] sm:$0xff]
  %v40 = vld [vmem:[%s0 + $0x30] sm:$0xff]
  %v41 = vld [vmem:[%s0 + $0x38] sm:$0xff]
  %v42 = vld [vmem:[%s1] sm:$0xff]
  %v43 = vld [vmem:[%s1 + $0x8] sm:$0xff]
  %v44 = vld [vmem:[%s1 + $0x10] sm:$0xff]
  %v45 = vld [vmem:[%s1 + $0x18] sm:$0xff]
  %v46 = vld [vmem:[%s2] sm:$0xff]
  %v47 = vld [vmem:[%s2 + $0x8] sm:$0xff]
  %v48 = vld [vmem:[%s2 + $0x10] sm:$0xff]
  %v49 = vld [vmem:[%s2 + $0x18] sm:$0xff]
  %v50 = vld [vmem:[%s3] sm:$0x1]
  %v52 = vperm.slane %v50, 0
  %vm54 = vcmask 261120
  %v56 = vsel %vm54, %v34, 0
  %v59 = vsel %vm54, %v35, 0
  %v62 = vsel %vm54, %v36, 0
  %v65 = vsel %vm54, %v37, 0
  %v68 = vsel %vm54, %v38, 0
  %v71 = vsel %vm54, %v39, 0
  %v74 = vsel %vm54, %v40, 0
  %v77 = vsel %vm54, %v41, 0
  %79 = vmatpush.msra.mxu0 0.0
  %80 = vmatpush.msra.mxu0 0.0
  %81 = vmatpush.msra.mxu0 0.0
  %82 = vmatpush.msra.mxu0 0.0
  %83 = vmatpush.msra.mxu0 0.0
  %84 = vmatpush.msra.mxu0 0.0
  %85 = vmatpush.msra.mxu0 0.0
  %86 = vmatpush.msra.mxu0 0.0
  %87 = vmatpush.msra.mxu0 0.0
  %88 = vmatpush.msra.mxu0 0.0
  %89 = vmatpush.msra.mxu0 0.0
  %90 = vmatpush.msra.mxu0 0.0
  %91 = vmatpush.msra.mxu0 %v45
  %92 = vmatpush.msra.mxu0 %v44
  %93 = vmatpush.msra.mxu0 %v43
  %94 = vmatpush.msra.mxu0 %v42
  %95 = vmatmul.f32.gmra.mxu0 %v56
  %v96 = vpop.f32.mrf.mxu0
  %v97 = vadd.f32 %v52, %v96
  %98 = vmatmul.f32.gmra.mxu0 %v59
  %v99 = vpop.f32.mrf.mxu0
  %v100 = vadd.f32 %v52, %v99
  %101 = vmatmul.f32.gmra.mxu0 %v62
  %v102 = vpop.f32.mrf.mxu0
  %v103 = vadd.f32 %v52, %v102
  %104 = vmatmul.f32.gmra.mxu0 %v65
  %v105 = vpop.f32.mrf.mxu0
  %v106 = vadd.f32 %v52, %v105
  %107 = vmatmul.f32.gmra.mxu0 %v68
  %v108 = vpop.f32.mrf.mxu0
  %v109 = vadd.f32 %v52, %v108
  %110 = vmatmul.f32.gmra.mxu0 %v71
  %v111 = vpop.f32.mrf.mxu0
  %v112 = vadd.f32 %v52, %v111
  %113 = vmatmul.f32.gmra.mxu0 %v74
  %v114 = vpop.f32.mrf.mxu0
  %v115 = vadd.f32 %v52, %v114
  %116 = vmatmul.f32.gmra.mxu0 %v77
  %v117 = vpop.f32.mrf.mxu0
  %v118 = vadd.f32 %v52, %v117
  %119 = vdwg.mxu0
  %v121 = vsel %vm54, 0.0, 0
  %123 = vmatpush.msra.mxu0 0.0
  %124 = vmatpush.msra.mxu0 0.0
  %125 = vmatpush.msra.mxu0 0.0
  %126 = vmatpush.msra.mxu0 0.0
  %127 = vmatpush.msra.mxu0 0.0
  %128 = vmatpush.msra.mxu0 0.0
  %129 = vmatpush.msra.mxu0 0.0
  %130 = vmatpush.msra.mxu0 0.0
  %131 = vmatpush.msra.mxu0 0.0
  %132 = vmatpush.msra.mxu0 0.0
  %133 = vmatpush.msra.mxu0 0.0
  %134 = vmatpush.msra.mxu0 0.0
  %135 = vmatpush.msra.mxu0 %v49
  %136 = vmatpush.msra.mxu0 %v48
  %137 = vmatpush.msra.mxu0 %v47
  %138 = vmatpush.msra.mxu0 %v46
  %139 = vmatmul.f32.gmra.mxu0 %v121
  %v140 = vpop.f32.mrf.mxu0
  %v141 = vadd.f32 0.0, %v140
  %142 = vdwg.mxu0
  %v143 = vadd.f32 %v97, %v141
  %v144 = vxor.u32 %v143, 2147483648
  %v145 = vmul.f32 %v144, 1.442695
  %v146 = vpow.pop %v145
  %v147 = vadd.f32 %v146, 1.0
  %v148 = vrcp.pop %v147
  %v149 = vmul.f32 %v147, %v148
  %v150 = vsub.f32 1.0, %v149
  %v151 = vmul.f32 %v148, %v150
  %v152 = vadd.f32 %v148, %v151
  %vm153 = vweird.f32 %v147
  %vm154 = vweird.f32 %v148
  %vm155 = vmor %vm153, %vm154
  %v156 = vsel %vm155, %v148, %v152
  %v157 = vand.u32 2147483647, %v147
  %vm158 = vcmp.eq.f32.partialorder %v157, 8.507059e+37
  %v159 = vand.u32 %v147, 2147483648
  %v160 = vor.u32 1.1754944e-38, %v159
  %v161 = vsel %vm158, %v160, %v156
  %v162 = vmul.f32 1.0, %v161
  %v163 = vtanh.pop %v143
  %v164 = vmul.f32 %v162, 0.0
  %166 = vrot.lane.b32.xlu0 %v163, 64
  %v167 = vpop.permute.xlu0 %166
  %v169 = vmul.f32 %v162, %v167
  %171 = vrot.lane.b32.xlu0 %v169, 32
  %v172 = vpop.permute.xlu0 %171
  %v174 = vadd.f32 %v164, %v172
  %v175 = vtanh.pop %v174
  %177 = vrot.lane.b32.xlu0 %v175, 64
  %v178 = vpop.permute.xlu0 %177
  %v180 = vmul.f32 %v162, %v178
  %182 = vrot.lane.b32.xlu0 %v180, 32
  %v183 = vpop.permute.xlu0 %182
  %185 = vst.msk [vmem:[#allocation2] sm:$0xff] %vm54, %v183
  %v186 = vsel %vm54, %v183, 0
  %188 = vmatpush.msra.mxu0 0.0
  %189 = vmatpush.msra.mxu0 0.0
  %190 = vmatpush.msra.mxu0 0.0
  %191 = vmatpush.msra.mxu0 0.0
  %192 = vmatpush.msra.mxu0 0.0
  %193 = vmatpush.msra.mxu0 0.0
  %194 = vmatpush.msra.mxu0 0.0
  %195 = vmatpush.msra.mxu0 0.0
  %196 = vmatpush.msra.mxu0 0.0
  %197 = vmatpush.msra.mxu0 0.0
  %198 = vmatpush.msra.mxu0 0.0
  %199 = vmatpush.msra.mxu0 0.0
  %200 = vmatpush.msra.mxu0 %v49
  %201 = vmatpush.msra.mxu0 %v48
  %202 = vmatpush.msra.mxu0 %v47
  %203 = vmatpush.msra.mxu0 %v46
  %204 = vmatmul.f32.gmra.mxu0 %v186
  %v205 = vpop.f32.mrf.mxu0
  %v206 = vadd.f32 0.0, %v205
  %207 = vdwg.mxu0
  %v208 = vadd.f32 %v100, %v206
  %v209 = vxor.u32 %v208, 2147483648
  %v210 = vmul.f32 %v209, 1.442695
  %v211 = vpow.pop %v210
  %v212 = vadd.f32 %v211, 1.0
  %v213 = vrcp.pop %v212
  %v214 = vmul.f32 %v212, %v213
  %v215 = vsub.f32 1.0, %v214
  %v216 = vmul.f32 %v213, %v215
  %v217 = vadd.f32 %v213, %v216
  %vm218 = vweird.f32 %v212
  %vm219 = vweird.f32 %v213
  %vm220 = vmor %vm218, %vm219
  %v221 = vsel %vm220, %v213, %v217
  %v222 = vand.u32 2147483647, %v212
  %vm223 = vcmp.eq.f32.partialorder %v222, 8.507059e+37
  %v224 = vand.u32 %v212, 2147483648
  %v225 = vor.u32 1.1754944e-38, %v224
  %v226 = vsel %vm223, %v225, %v221
  %v227 = vmul.f32 1.0, %v226
  %v228 = vtanh.pop %v208
  %v229 = vmul.f32 %v227, %v174
  %231 = vrot.lane.b32.xlu0 %v228, 64
  %v232 = vpop.permute.xlu0 %231
  %v234 = vmul.f32 %v227, %v232
  %236 = vrot.lane.b32.xlu0 %v234, 32
  %v237 = vpop.permute.xlu0 %236
  %v239 = vadd.f32 %v229, %v237
  %v240 = vtanh.pop %v239
  %242 = vrot.lane.b32.xlu0 %v240, 64
  %v243 = vpop.permute.xlu0 %242
  %v245 = vmul.f32 %v227, %v243
  %247 = vrot.lane.b32.xlu0 %v245, 32
  %v248 = vpop.permute.xlu0 %247
  %250 = vst.msk [vmem:[#allocation2 + $0x8] sm:$0xff] %vm54, %v248
  %v251 = vsel %vm54, %v248, 0
  %253 = vmatpush.msra.mxu0 0.0
  %254 = vmatpush.msra.mxu0 0.0
  %255 = vmatpush.msra.mxu0 0.0
  %256 = vmatpush.msra.mxu0 0.0
  %257 = vmatpush.msra.mxu0 0.0
  %258 = vmatpush.msra.mxu0 0.0
  %259 = vmatpush.msra.mxu0 0.0
  %260 = vmatpush.msra.mxu0 0.0
  %261 = vmatpush.msra.mxu0 0.0
  %262 = vmatpush.msra.mxu0 0.0
  %263 = vmatpush.msra.mxu0 0.0
  %264 = vmatpush.msra.mxu0 0.0
  %265 = vmatpush.msra.mxu0 %v49
  %266 = vmatpush.msra.mxu0 %v48
  %267 = vmatpush.msra.mxu0 %v47
  %268 = vmatpush.msra.mxu0 %v46
  %269 = vmatmul.f32.gmra.mxu0 %v251
  %v270 = vpop.f32.mrf.mxu0
  %v271 = vadd.f32 0.0, %v270
  %272 = vdwg.mxu0
  %v273 = vadd.f32 %v103, %v271
  %v274 = vxor.u32 %v273, 2147483648
  %v275 = vmul.f32 %v274, 1.442695
  %v276 = vpow.pop %v275
  %v277 = vadd.f32 %v276, 1.0
  %v278 = vrcp.pop %v277
  %v279 = vmul.f32 %v277, %v278
  %v280 = vsub.f32 1.0, %v279
  %v281 = vmul.f32 %v278, %v280
  %v282 = vadd.f32 %v278, %v281
  %vm283 = vweird.f32 %v277
  %vm284 = vweird.f32 %v278
  %vm285 = vmor %vm283, %vm284
  %v286 = vsel %vm285, %v278, %v282
  %v287 = vand.u32 2147483647, %v277
  %vm288 = vcmp.eq.f32.partialorder %v287, 8.507059e+37
  %v289 = vand.u32 %v277, 2147483648
  %v290 = vor.u32 1.1754944e-38, %v289
  %v291 = vsel %vm288, %v290, %v286
  %v292 = vmul.f32 1.0, %v291
  %v293 = vtanh.pop %v273
  %v294 = vmul.f32 %v292, %v239
  %296 = vrot.lane.b32.xlu0 %v293, 64
  %v297 = vpop.permute.xlu0 %296
  %v299 = vmul.f32 %v292, %v297
  %301 = vrot.lane.b32.xlu0 %v299, 32
  %v302 = vpop.permute.xlu0 %301
  %v304 = vadd.f32 %v294, %v302
  %v305 = vtanh.pop %v304
  %307 = vrot.lane.b32.xlu0 %v305, 64
  %v308 = vpop.permute.xlu0 %307
  %v310 = vmul.f32 %v292, %v308
  %312 = vrot.lane.b32.xlu0 %v310, 32
  %v313 = vpop.permute.xlu0 %312
  %315 = vst.msk [vmem:[#allocation2 + $0x10] sm:$0xff] %vm54, %v313
  %v316 = vsel %vm54, %v313, 0
  %318 = vmatpush.msra.mxu0 0.0
  %319 = vmatpush.msra.mxu0 0.0
  %320 = vmatpush.msra.mxu0 0.0
  %321 = vmatpush.msra.mxu0 0.0
  %322 = vmatpush.msra.mxu0 0.0
  %323 = vmatpush.msra.mxu0 0.0
  %324 = vmatpush.msra.mxu0 0.0
  %325 = vmatpush.msra.mxu0 0.0
  %326 = vmatpush.msra.mxu0 0.0
  %327 = vmatpush.msra.mxu0 0.0
  %328 = vmatpush.msra.mxu0 0.0
  %329 = vmatpush.msra.mxu0 0.0
  %330 = vmatpush.msra.mxu0 %v49
  %331 = vmatpush.msra.mxu0 %v48
  %332 = vmatpush.msra.mxu0 %v47
  %333 = vmatpush.msra.mxu0 %v46
  %334 = vmatmul.f32.gmra.mxu0 %v316
  %v335 = vpop.f32.mrf.mxu0
  %v336 = vadd.f32 0.0, %v335
  %337 = vdwg.mxu0
  %v338 = vadd.f32 %v106, %v336
  %v339 = vxor.u32 %v338, 2147483648
  %v340 = vmul.f32 %v339, 1.442695
  %v341 = vpow.pop %v340
  %v342 = vadd.f32 %v341, 1.0
  %v343 = vrcp.pop %v342
  %v344 = vmul.f32 %v342, %v343
  %v345 = vsub.f32 1.0, %v344
  %v346 = vmul.f32 %v343, %v345
  %v347 = vadd.f32 %v343, %v346
  %vm348 = vweird.f32 %v342
  %vm349 = vweird.f32 %v343
  %vm350 = vmor %vm348, %vm349
  %v351 = vsel %vm350, %v343, %v347
  %v352 = vand.u32 2147483647, %v342
  %vm353 = vcmp.eq.f32.partialorder %v352, 8.507059e+37
  %v354 = vand.u32 %v342, 2147483648
  %v355 = vor.u32 1.1754944e-38, %v354
  %v356 = vsel %vm353, %v355, %v351
  %v357 = vmul.f32 1.0, %v356
  %v358 = vtanh.pop %v338
  %v359 = vmul.f32 %v357, %v304
  %361 = vrot.lane.b32.xlu0 %v358, 64
  %v362 = vpop.permute.xlu0 %361
  %v364 = vmul.f32 %v357, %v362
  %366 = vrot.lane.b32.xlu0 %v364, 32
  %v367 = vpop.permute.xlu0 %366
  %v369 = vadd.f32 %v359, %v367
  %v370 = vtanh.pop %v369
  %372 = vrot.lane.b32.xlu0 %v370, 64
  %v373 = vpop.permute.xlu0 %372
  %v375 = vmul.f32 %v357, %v373
  %377 = vrot.lane.b32.xlu0 %v375, 32
  %v378 = vpop.permute.xlu0 %377
  %380 = vst.msk [vmem:[#allocation2 + $0x18] sm:$0xff] %vm54, %v378
  %v381 = vsel %vm54, %v378, 0
  %383 = vmatpush.msra.mxu0 0.0
  %384 = vmatpush.msra.mxu0 0.0
  %385 = vmatpush.msra.mxu0 0.0
  %386 = vmatpush.msra.mxu0 0.0
  %387 = vmatpush.msra.mxu0 0.0
  %388 = vmatpush.msra.mxu0 0.0
  %389 = vmatpush.msra.mxu0 0.0
  %390 = vmatpush.msra.mxu0 0.0
  %391 = vmatpush.msra.mxu0 0.0
  %392 = vmatpush.msra.mxu0 0.0
  %393 = vmatpush.msra.mxu0 0.0
  %394 = vmatpush.msra.mxu0 0.0
  %395 = vmatpush.msra.mxu0 %v49
  %396 = vmatpush.msra.mxu0 %v48
  %397 = vmatpush.msra.mxu0 %v47
  %398 = vmatpush.msra.mxu0 %v46
  %399 = vmatmul.f32.gmra.mxu0 %v381
  %v400 = vpop.f32.mrf.mxu0
  %v401 = vadd.f32 0.0, %v400
  %402 = vdwg.mxu0
  %v403 = vadd.f32 %v109, %v401
  %v404 = vxor.u32 %v403, 2147483648
  %v405 = vmul.f32 %v404, 1.442695
  %v406 = vpow.pop %v405
  %v407 = vadd.f32 %v406, 1.0
  %v408 = vrcp.pop %v407
  %v409 = vmul.f32 %v407, %v408
  %v410 = vsub.f32 1.0, %v409
  %v411 = vmul.f32 %v408, %v410
  %v412 = vadd.f32 %v408, %v411
  %vm413 = vweird.f32 %v407
  %vm414 = vweird.f32 %v408
  %vm415 = vmor %vm413, %vm414
  %v416 = vsel %vm415, %v408, %v412
  %v417 = vand.u32 2147483647, %v407
  %vm418 = vcmp.eq.f32.partialorder %v417, 8.507059e+37
  %v419 = vand.u32 %v407, 2147483648
  %v420 = vor.u32 1.1754944e-38, %v419
  %v421 = vsel %vm418, %v420, %v416
  %v422 = vmul.f32 1.0, %v421
  %v423 = vtanh.pop %v403
  %v424 = vmul.f32 %v422, %v369
  %426 = vrot.lane.b32.xlu0 %v423, 64
  %v427 = vpop.permute.xlu0 %426
  %v429 = vmul.f32 %v422, %v427
  %431 = vrot.lane.b32.xlu0 %v429, 32
  %v432 = vpop.permute.xlu0 %431
  %v434 = vadd.f32 %v424, %v432
  %v435 = vtanh.pop %v434
  %437 = vrot.lane.b32.xlu0 %v435, 64
  %v438 = vpop.permute.xlu0 %437
  %v440 = vmul.f32 %v422, %v438
  %442 = vrot.lane.b32.xlu0 %v440, 32
  %v443 = vpop.permute.xlu0 %442
  %445 = vst.msk [vmem:[#allocation2 + $0x20] sm:$0xff] %vm54, %v443
  %v446 = vsel %vm54, %v443, 0
  %448 = vmatpush.msra.mxu0 0.0
  %449 = vmatpush.msra.mxu0 0.0
  %450 = vmatpush.msra.mxu0 0.0
  %451 = vmatpush.msra.mxu0 0.0
  %452 = vmatpush.msra.mxu0 0.0
  %453 = vmatpush.msra.mxu0 0.0
  %454 = vmatpush.msra.mxu0 0.0
  %455 = vmatpush.msra.mxu0 0.0
  %456 = vmatpush.msra.mxu0 0.0
  %457 = vmatpush.msra.mxu0 0.0
  %458 = vmatpush.msra.mxu0 0.0
  %459 = vmatpush.msra.mxu0 0.0
  %460 = vmatpush.msra.mxu0 %v49
  %461 = vmatpush.msra.mxu0 %v48
  %462 = vmatpush.msra.mxu0 %v47
  %463 = vmatpush.msra.mxu0 %v46
  %464 = vmatmul.f32.gmra.mxu0 %v446
  %v465 = vpop.f32.mrf.mxu0
  %v466 = vadd.f32 0.0, %v465
  %467 = vdwg.mxu0
  %v468 = vadd.f32 %v112, %v466
  %v469 = vxor.u32 %v468, 2147483648
  %v470 = vmul.f32 %v469, 1.442695
  %v471 = vpow.pop %v470
  %v472 = vadd.f32 %v471, 1.0
  %v473 = vrcp.pop %v472
  %v474 = vmul.f32 %v472, %v473
  %v475 = vsub.f32 1.0, %v474
  %v476 = vmul.f32 %v473, %v475
  %v477 = vadd.f32 %v473, %v476
  %vm478 = vweird.f32 %v472
  %vm479 = vweird.f32 %v473
  %vm480 = vmor %vm478, %vm479
  %v481 = vsel %vm480, %v473, %v477
  %v482 = vand.u32 2147483647, %v472
  %vm483 = vcmp.eq.f32.partialorder %v482, 8.507059e+37
  %v484 = vand.u32 %v472, 2147483648
  %v485 = vor.u32 1.1754944e-38, %v484
  %v486 = vsel %vm483, %v485, %v481
  %v487 = vmul.f32 1.0, %v486
  %v488 = vtanh.pop %v468
  %v489 = vmul.f32 %v487, %v434
  %491 = vrot.lane.b32.xlu0 %v488, 64
  %v492 = vpop.permute.xlu0 %491
  %v494 = vmul.f32 %v487, %v492
  %496 = vrot.lane.b32.xlu0 %v494, 32
  %v497 = vpop.permute.xlu0 %496
  %v499 = vadd.f32 %v489, %v497
  %v500 = vtanh.pop %v499
  %502 = vrot.lane.b32.xlu0 %v500, 64
  %v503 = vpop.permute.xlu0 %502
  %v505 = vmul.f32 %v487, %v503
  %507 = vrot.lane.b32.xlu0 %v505, 32
  %v508 = vpop.permute.xlu0 %507
  %510 = vst.msk [vmem:[#allocation2 + $0x28] sm:$0xff] %vm54, %v508
  %v511 = vsel %vm54, %v508, 0
  %513 = vmatpush.msra.mxu0 0.0
  %514 = vmatpush.msra.mxu0 0.0
  %515 = vmatpush.msra.mxu0 0.0
  %516 = vmatpush.msra.mxu0 0.0
  %517 = vmatpush.msra.mxu0 0.0
  %518 = vmatpush.msra.mxu0 0.0
  %519 = vmatpush.msra.mxu0 0.0
  %520 = vmatpush.msra.mxu0 0.0
  %521 = vmatpush.msra.mxu0 0.0
  %522 = vmatpush.msra.mxu0 0.0
  %523 = vmatpush.msra.mxu0 0.0
  %524 = vmatpush.msra.mxu0 0.0
  %525 = vmatpush.msra.mxu0 %v49
  %526 = vmatpush.msra.mxu0 %v48
  %527 = vmatpush.msra.mxu0 %v47
  %528 = vmatpush.msra.mxu0 %v46
  %529 = vmatmul.f32.gmra.mxu0 %v511
  %v530 = vpop.f32.mrf.mxu0
  %v531 = vadd.f32 0.0, %v530
  %532 = vdwg.mxu0
  %v533 = vadd.f32 %v115, %v531
  %v534 = vxor.u32 %v533, 2147483648
  %v535 = vmul.f32 %v534, 1.442695
  %v536 = vpow.pop %v535
  %v537 = vadd.f32 %v536, 1.0
  %v538 = vrcp.pop %v537
  %v539 = vmul.f32 %v537, %v538
  %v540 = vsub.f32 1.0, %v539
  %v541 = vmul.f32 %v538, %v540
  %v542 = vadd.f32 %v538, %v541
  %vm543 = vweird.f32 %v537
  %vm544 = vweird.f32 %v538
  %vm545 = vmor %vm543, %vm544
  %v546 = vsel %vm545, %v538, %v542
  %v547 = vand.u32 2147483647, %v537
  %vm548 = vcmp.eq.f32.partialorder %v547, 8.507059e+37
  %v549 = vand.u32 %v537, 2147483648
  %v550 = vor.u32 1.1754944e-38, %v549
  %v551 = vsel %vm548, %v550, %v546
  %v552 = vmul.f32 1.0, %v551
  %v553 = vtanh.pop %v533
  %v554 = vmul.f32 %v552, %v499
  %556 = vrot.lane.b32.xlu0 %v553, 64
  %v557 = vpop.permute.xlu0 %556
  %v559 = vmul.f32 %v552, %v557
  %561 = vrot.lane.b32.xlu0 %v559, 32
  %v562 = vpop.permute.xlu0 %561
  %v564 = vadd.f32 %v554, %v562
  %v565 = vtanh.pop %v564
  %567 = vrot.lane.b32.xlu0 %v565, 64
  %v568 = vpop.permute.xlu0 %567
  %v570 = vmul.f32 %v552, %v568
  %572 = vrot.lane.b32.xlu0 %v570, 32
  %v573 = vpop.permute.xlu0 %572
  %575 = vst.msk [vmem:[#allocation2 + $0x30] sm:$0xff] %vm54, %v573
  %v576 = vsel %vm54, %v573, 0
  %578 = vmatpush.msra.mxu0 0.0
  %579 = vmatpush.msra.mxu0 0.0
  %580 = vmatpush.msra.mxu0 0.0
  %581 = vmatpush.msra.mxu0 0.0
  %582 = vmatpush.msra.mxu0 0.0
  %583 = vmatpush.msra.mxu0 0.0
  %584 = vmatpush.msra.mxu0 0.0
  %585 = vmatpush.msra.mxu0 0.0
  %586 = vmatpush.msra.mxu0 0.0
  %587 = vmatpush.msra.mxu0 0.0
  %588 = vmatpush.msra.mxu0 0.0
  %589 = vmatpush.msra.mxu0 0.0
  %590 = vmatpush.msra.mxu0 %v49
  %591 = vmatpush.msra.mxu0 %v48
  %592 = vmatpush.msra.mxu0 %v47
  %593 = vmatpush.msra.mxu0 %v46
  %594 = vmatmul.f32.gmra.mxu0 %v576
  %v595 = vpop.f32.mrf.mxu0
  %v596 = vadd.f32 0.0, %v595
  %597 = vdwg.mxu0
  %v598 = vadd.f32 %v118, %v596
  %v599 = vxor.u32 %v598, 2147483648
  %v600 = vmul.f32 %v599, 1.442695
  %v601 = vpow.pop %v600
  %v602 = vadd.f32 %v601, 1.0
  %v603 = vrcp.pop %v602
  %v604 = vmul.f32 %v602, %v603
  %v605 = vsub.f32 1.0, %v604
  %v606 = vmul.f32 %v603, %v605
  %v607 = vadd.f32 %v603, %v606
  %vm608 = vweird.f32 %v602
  %vm609 = vweird.f32 %v603
  %vm610 = vmor %vm608, %vm609
  %v611 = vsel %vm610, %v603, %v607
  %v612 = vand.u32 2147483647, %v602
  %vm613 = vcmp.eq.f32.partialorder %v612, 8.507059e+37
  %v614 = vand.u32 %v602, 2147483648
  %v615 = vor.u32 1.1754944e-38, %v614
  %v616 = vsel %vm613, %v615, %v611
  %v617 = vmul.f32 1.0, %v616
  %v618 = vtanh.pop %v598
  %v619 = vmul.f32 %v617, %v564
  %621 = vrot.lane.b32.xlu0 %v618, 64
  %v622 = vpop.permute.xlu0 %621
  %v624 = vmul.f32 %v617, %v622
  %626 = vrot.lane.b32.xlu0 %v624, 32
  %v627 = vpop.permute.xlu0 %626
  %v629 = vadd.f32 %v619, %v627
  %v630 = vtanh.pop %v629
  %632 = vrot.lane.b32.xlu0 %v630, 64
  %v633 = vpop.permute.xlu0 %632
  %v635 = vmul.f32 %v617, %v633
  %637 = vrot.lane.b32.xlu0 %v635, 32
  %v638 = vpop.permute.xlu0 %637
  %640 = vst.msk [vmem:[#allocation2 + $0x38] sm:$0xff] %vm54, %v638
  %v641 = vld [vmem:[#allocation2] sm:$0xff]
  %v642 = vld [vmem:[#allocation2 + $0x8] sm:$0xff]
  %v643 = vld [vmem:[#allocation2 + $0x10] sm:$0xff]
  %v644 = vld [vmem:[#allocation2 + $0x18] sm:$0xff]
  %v645 = vld [vmem:[#allocation2 + $0x20] sm:$0xff]
  %v646 = vld [vmem:[#allocation2 + $0x28] sm:$0xff]
  %v647 = vld [vmem:[#allocation2 + $0x30] sm:$0xff]
  %v648 = vld [vmem:[#allocation2 + $0x38] sm:$0xff]
  %v649 = vld [vmem:[%s4] sm:$0xff]
  %v650 = vld [vmem:[%s4 + $0x8] sm:$0xff]
  %v651 = vld [vmem:[%s4 + $0x10] sm:$0xff]
  %v652 = vld [vmem:[%s4 + $0x18] sm:$0xff]
  %v653 = vld [vmem:[%s5] sm:$0xff]
  %v654 = vld [vmem:[%s5 + $0x8] sm:$0xff]
  %v655 = vld [vmem:[%s5 + $0x10] sm:$0xff]
  %v656 = vld [vmem:[%s5 + $0x18] sm:$0xff]
  %v657 = vld [vmem:[%s6] sm:$0x1]
  %v659 = vperm.slane %v657, 0
  %v662 = vsel %vm54, %v641, 0
  %v665 = vsel %vm54, %v642, 0
  %v668 = vsel %vm54, %v643, 0
  %v671 = vsel %vm54, %v644, 0
  %v674 = vsel %vm54, %v645, 0
  %v677 = vsel %vm54, %v646, 0
  %v680 = vsel %vm54, %v647, 0
  %v683 = vsel %vm54, %v648, 0
  %685 = vmatpush.msra.mxu0 0.0
  %686 = vmatpush.msra.mxu0 0.0
  %687 = vmatpush.msra.mxu0 0.0
  %688 = vmatpush.msra.mxu0 0.0
  %689 = vmatpush.msra.mxu0 0.0
  %690 = vmatpush.msra.mxu0 0.0
  %691 = vmatpush.msra.mxu0 0.0
  %692 = vmatpush.msra.mxu0 0.0
  %693 = vmatpush.msra.mxu0 0.0
  %694 = vmatpush.msra.mxu0 0.0
  %695 = vmatpush.msra.mxu0 0.0
  %696 = vmatpush.msra.mxu0 0.0
  %697 = vmatpush.msra.mxu0 %v652
  %698 = vmatpush.msra.mxu0 %v651
  %699 = vmatpush.msra.mxu0 %v650
  %700 = vmatpush.msra.mxu0 %v649
  %701 = vmatmul.f32.gmra.mxu0 %v662
  %v702 = vpop.f32.mrf.mxu0
  %v703 = vadd.f32 %v659, %v702
  %704 = vmatmul.f32.gmra.mxu0 %v665
  %v705 = vpop.f32.mrf.mxu0
  %v706 = vadd.f32 %v659, %v705
  %707 = vmatmul.f32.gmra.mxu0 %v668
  %v708 = vpop.f32.mrf.mxu0
  %v709 = vadd.f32 %v659, %v708
  %710 = vmatmul.f32.gmra.mxu0 %v671
  %v711 = vpop.f32.mrf.mxu0
  %v712 = vadd.f32 %v659, %v711
  %713 = vmatmul.f32.gmra.mxu0 %v674
  %v714 = vpop.f32.mrf.mxu0
  %v715 = vadd.f32 %v659, %v714
  %716 = vmatmul.f32.gmra.mxu0 %v677
  %v717 = vpop.f32.mrf.mxu0
  %v718 = vadd.f32 %v659, %v717
  %719 = vmatmul.f32.gmra.mxu0 %v680
  %v720 = vpop.f32.mrf.mxu0
  %v721 = vadd.f32 %v659, %v720
  %722 = vmatmul.f32.gmra.mxu0 %v683
  %v723 = vpop.f32.mrf.mxu0
  %v724 = vadd.f32 %v659, %v723
  %725 = vdwg.mxu0
  %726 = vmatpush.msra.mxu0 0.0
  %727 = vmatpush.msra.mxu0 0.0
  %728 = vmatpush.msra.mxu0 0.0
  %729 = vmatpush.msra.mxu0 0.0
  %730 = vmatpush.msra.mxu0 0.0
  %731 = vmatpush.msra.mxu0 0.0
  %732 = vmatpush.msra.mxu0 0.0
  %733 = vmatpush.msra.mxu0 0.0
  %734 = vmatpush.msra.mxu0 0.0
  %735 = vmatpush.msra.mxu0 0.0
  %736 = vmatpush.msra.mxu0 0.0
  %737 = vmatpush.msra.mxu0 0.0
  %738 = vmatpush.msra.mxu0 %v656
  %739 = vmatpush.msra.mxu0 %v655
  %740 = vmatpush.msra.mxu0 %v654
  %741 = vmatpush.msra.mxu0 %v653
  %742 = vmatmul.f32.gmra.mxu0 %v121
  %v743 = vpop.f32.mrf.mxu0
  %v744 = vadd.f32 0.0, %v743
  %745 = vdwg.mxu0
  %v746 = vadd.f32 %v703, %v744
  %v747 = vxor.u32 %v746, 2147483648
  %v748 = vmul.f32 %v747, 1.442695
  %v749 = vpow.pop %v748
  %v750 = vadd.f32 %v749, 1.0
  %v751 = vrcp.pop %v750
  %v752 = vmul.f32 %v750, %v751
  %v753 = vsub.f32 1.0, %v752
  %v754 = vmul.f32 %v751, %v753
  %v755 = vadd.f32 %v751, %v754
  %vm756 = vweird.f32 %v750
  %vm757 = vweird.f32 %v751
  %vm758 = vmor %vm756, %vm757
  %v759 = vsel %vm758, %v751, %v755
  %v760 = vand.u32 2147483647, %v750
  %vm761 = vcmp.eq.f32.partialorder %v760, 8.507059e+37
  %v762 = vand.u32 %v750, 2147483648
  %v763 = vor.u32 1.1754944e-38, %v762
  %v764 = vsel %vm761, %v763, %v759
  %v765 = vmul.f32 1.0, %v764
  %v766 = vtanh.pop %v746
  %v767 = vmul.f32 %v765, 0.0
  %769 = vrot.lane.b32.xlu0 %v766, 64
  %v770 = vpop.permute.xlu0 %769
  %v772 = vmul.f32 %v765, %v770
  %774 = vrot.lane.b32.xlu0 %v772, 32
  %v775 = vpop.permute.xlu0 %774
  %v777 = vadd.f32 %v767, %v775
  %v778 = vtanh.pop %v777
  %780 = vrot.lane.b32.xlu0 %v778, 64
  %v781 = vpop.permute.xlu0 %780
  %v783 = vmul.f32 %v765, %v781
  %785 = vrot.lane.b32.xlu0 %v783, 32
  %v786 = vpop.permute.xlu0 %785
  %v787 = vsel %vm54, %v786, 0
  %789 = vmatpush.msra.mxu0 0.0
  %790 = vmatpush.msra.mxu0 0.0
  %791 = vmatpush.msra.mxu0 0.0
  %792 = vmatpush.msra.mxu0 0.0
  %793 = vmatpush.msra.mxu0 0.0
  %794 = vmatpush.msra.mxu0 0.0
  %795 = vmatpush.msra.mxu0 0.0
  %796 = vmatpush.msra.mxu0 0.0
  %797 = vmatpush.msra.mxu0 0.0
  %798 = vmatpush.msra.mxu0 0.0
  %799 = vmatpush.msra.mxu0 0.0
  %800 = vmatpush.msra.mxu0 0.0
  %801 = vmatpush.msra.mxu0 %v656
  %802 = vmatpush.msra.mxu0 %v655
  %803 = vmatpush.msra.mxu0 %v654
  %804 = vmatpush.msra.mxu0 %v653
  %805 = vmatmul.f32.gmra.mxu0 %v787
  %v806 = vpop.f32.mrf.mxu0
  %v807 = vadd.f32 0.0, %v806
  %808 = vdwg.mxu0
  %v809 = vadd.f32 %v706, %v807
  %v810 = vxor.u32 %v809, 2147483648
  %v811 = vmul.f32 %v810, 1.442695
  %v812 = vpow.pop %v811
  %v813 = vadd.f32 %v812, 1.0
  %v814 = vrcp.pop %v813
  %v815 = vmul.f32 %v813, %v814
  %v816 = vsub.f32 1.0, %v815
  %v817 = vmul.f32 %v814, %v816
  %v818 = vadd.f32 %v814, %v817
  %vm819 = vweird.f32 %v813
  %vm820 = vweird.f32 %v814
  %vm821 = vmor %vm819, %vm820
  %v822 = vsel %vm821, %v814, %v818
  %v823 = vand.u32 2147483647, %v813
  %vm824 = vcmp.eq.f32.partialorder %v823, 8.507059e+37
  %v825 = vand.u32 %v813, 2147483648
  %v826 = vor.u32 1.1754944e-38, %v825
  %v827 = vsel %vm824, %v826, %v822
  %v828 = vmul.f32 1.0, %v827
  %v829 = vtanh.pop %v809
  %v830 = vmul.f32 %v828, %v777
  %832 = vrot.lane.b32.xlu0 %v829, 64
  %v833 = vpop.permute.xlu0 %832
  %v835 = vmul.f32 %v828, %v833
  %837 = vrot.lane.b32.xlu0 %v835, 32
  %v838 = vpop.permute.xlu0 %837
  %v840 = vadd.f32 %v830, %v838
  %v841 = vtanh.pop %v840
  %843 = vrot.lane.b32.xlu0 %v841, 64
  %v844 = vpop.permute.xlu0 %843
  %v846 = vmul.f32 %v828, %v844
  %848 = vrot.lane.b32.xlu0 %v846, 32
  %v849 = vpop.permute.xlu0 %848
  %v850 = vsel %vm54, %v849, 0
  %852 = vmatpush.msra.mxu0 0.0
  %853 = vmatpush.msra.mxu0 0.0
  %854 = vmatpush.msra.mxu0 0.0
  %855 = vmatpush.msra.mxu0 0.0
  %856 = vmatpush.msra.mxu0 0.0
  %857 = vmatpush.msra.mxu0 0.0
  %858 = vmatpush.msra.mxu0 0.0
  %859 = vmatpush.msra.mxu0 0.0
  %860 = vmatpush.msra.mxu0 0.0
  %861 = vmatpush.msra.mxu0 0.0
  %862 = vmatpush.msra.mxu0 0.0
  %863 = vmatpush.msra.mxu0 0.0
  %864 = vmatpush.msra.mxu0 %v656
  %865 = vmatpush.msra.mxu0 %v655
  %866 = vmatpush.msra.mxu0 %v654
  %867 = vmatpush.msra.mxu0 %v653
  %868 = vmatmul.f32.gmra.mxu0 %v850
  %v869 = vpop.f32.mrf.mxu0
  %v870 = vadd.f32 0.0, %v869
  %871 = vdwg.mxu0
  %v872 = vadd.f32 %v709, %v870
  %v873 = vxor.u32 %v872, 2147483648
  %v874 = vmul.f32 %v873, 1.442695
  %v875 = vpow.pop %v874
  %v876 = vadd.f32 %v875, 1.0
  %v877 = vrcp.pop %v876
  %v878 = vmul.f32 %v876, %v877
  %v879 = vsub.f32 1.0, %v878
  %v880 = vmul.f32 %v877, %v879
  %v881 = vadd.f32 %v877, %v880
  %vm882 = vweird.f32 %v876
  %vm883 = vweird.f32 %v877
  %vm884 = vmor %vm882, %vm883
  %v885 = vsel %vm884, %v877, %v881
  %v886 = vand.u32 2147483647, %v876
  %vm887 = vcmp.eq.f32.partialorder %v886, 8.507059e+37
  %v888 = vand.u32 %v876, 2147483648
  %v889 = vor.u32 1.1754944e-38, %v888
  %v890 = vsel %vm887, %v889, %v885
  %v891 = vmul.f32 1.0, %v890
  %v892 = vtanh.pop %v872
  %v893 = vmul.f32 %v891, %v840
  %895 = vrot.lane.b32.xlu0 %v892, 64
  %v896 = vpop.permute.xlu0 %895
  %v898 = vmul.f32 %v891, %v896
  %900 = vrot.lane.b32.xlu0 %v898, 32
  %v901 = vpop.permute.xlu0 %900
  %v903 = vadd.f32 %v893, %v901
  %v904 = vtanh.pop %v903
  %906 = vrot.lane.b32.xlu0 %v904, 64
  %v907 = vpop.permute.xlu0 %906
  %v909 = vmul.f32 %v891, %v907
  %911 = vrot.lane.b32.xlu0 %v909, 32
  %v912 = vpop.permute.xlu0 %911
  %v913 = vsel %vm54, %v912, 0
  %915 = vmatpush.msra.mxu0 0.0
  %916 = vmatpush.msra.mxu0 0.0
  %917 = vmatpush.msra.mxu0 0.0
  %918 = vmatpush.msra.mxu0 0.0
  %919 = vmatpush.msra.mxu0 0.0
  %920 = vmatpush.msra.mxu0 0.0
  %921 = vmatpush.msra.mxu0 0.0
  %922 = vmatpush.msra.mxu0 0.0
  %923 = vmatpush.msra.mxu0 0.0
  %924 = vmatpush.msra.mxu0 0.0
  %925 = vmatpush.msra.mxu0 0.0
  %926 = vmatpush.msra.mxu0 0.0
  %927 = vmatpush.msra.mxu0 %v656
  %928 = vmatpush.msra.mxu0 %v655
  %929 = vmatpush.msra.mxu0 %v654
  %930 = vmatpush.msra.mxu0 %v653
  %931 = vmatmul.f32.gmra.mxu0 %v913
  %v932 = vpop.f32.mrf.mxu0
  %v933 = vadd.f32 0.0, %v932
  %934 = vdwg.mxu0
  %v935 = vadd.f32 %v712, %v933
  %v936 = vxor.u32 %v935, 2147483648
  %v937 = vmul.f32 %v936, 1.442695
  %v938 = vpow.pop %v937
  %v939 = vadd.f32 %v938, 1.0
  %v940 = vrcp.pop %v939
  %v941 = vmul.f32 %v939, %v940
  %v942 = vsub.f32 1.0, %v941
  %v943 = vmul.f32 %v940, %v942
  %v944 = vadd.f32 %v940, %v943
  %vm945 = vweird.f32 %v939
  %vm946 = vweird.f32 %v940
  %vm947 = vmor %vm945, %vm946
  %v948 = vsel %vm947, %v940, %v944
  %v949 = vand.u32 2147483647, %v939
  %vm950 = vcmp.eq.f32.partialorder %v949, 8.507059e+37
  %v951 = vand.u32 %v939, 2147483648
  %v952 = vor.u32 1.1754944e-38, %v951
  %v953 = vsel %vm950, %v952, %v948
  %v954 = vmul.f32 1.0, %v953
  %v955 = vtanh.pop %v935
  %v956 = vmul.f32 %v954, %v903
  %958 = vrot.lane.b32.xlu0 %v955, 64
  %v959 = vpop.permute.xlu0 %958
  %v961 = vmul.f32 %v954, %v959
  %963 = vrot.lane.b32.xlu0 %v961, 32
  %v964 = vpop.permute.xlu0 %963
  %v966 = vadd.f32 %v956, %v964
  %v967 = vtanh.pop %v966
  %969 = vrot.lane.b32.xlu0 %v967, 64
  %v970 = vpop.permute.xlu0 %969
  %v972 = vmul.f32 %v954, %v970
  %974 = vrot.lane.b32.xlu0 %v972, 32
  %v975 = vpop.permute.xlu0 %974
  %v976 = vsel %vm54, %v975, 0
  %978 = vmatpush.msra.mxu0 0.0
  %979 = vmatpush.msra.mxu0 0.0
  %980 = vmatpush.msra.mxu0 0.0
  %981 = vmatpush.msra.mxu0 0.0
  %982 = vmatpush.msra.mxu0 0.0
  %983 = vmatpush.msra.mxu0 0.0
  %984 = vmatpush.msra.mxu0 0.0
  %985 = vmatpush.msra.mxu0 0.0
  %986 = vmatpush.msra.mxu0 0.0
  %987 = vmatpush.msra.mxu0 0.0
  %988 = vmatpush.msra.mxu0 0.0
  %989 = vmatpush.msra.mxu0 0.0
  %990 = vmatpush.msra.mxu0 %v656
  %991 = vmatpush.msra.mxu0 %v655
  %992 = vmatpush.msra.mxu0 %v654
  %993 = vmatpush.msra.mxu0 %v653
  %994 = vmatmul.f32.gmra.mxu0 %v976
  %v995 = vpop.f32.mrf.mxu0
  %v996 = vadd.f32 0.0, %v995
  %997 = vdwg.mxu0
  %v998 = vadd.f32 %v715, %v996
  %v999 = vxor.u32 %v998, 2147483648
  %v1000 = vmul.f32 %v999, 1.442695
  %v1001 = vpow.pop %v1000
  %v1002 = vadd.f32 %v1001, 1.0
  %v1003 = vrcp.pop %v1002
  %v1004 = vmul.f32 %v1002, %v1003
  %v1005 = vsub.f32 1.0, %v1004
  %v1006 = vmul.f32 %v1003, %v1005
  %v1007 = vadd.f32 %v1003, %v1006
  %vm1008 = vweird.f32 %v1002
  %vm1009 = vweird.f32 %v1003
  %vm1010 = vmor %vm1008, %vm1009
  %v1011 = vsel %vm1010, %v1003, %v1007
  %v1012 = vand.u32 2147483647, %v1002
  %vm1013 = vcmp.eq.f32.partialorder %v1012, 8.507059e+37
  %v1014 = vand.u32 %v1002, 2147483648
  %v1015 = vor.u32 1.1754944e-38, %v1014
  %v1016 = vsel %vm1013, %v1015, %v1011
  %v1017 = vmul.f32 1.0, %v1016
  %v1018 = vtanh.pop %v998
  %v1019 = vmul.f32 %v1017, %v966
  %1021 = vrot.lane.b32.xlu0 %v1018, 64
  %v1022 = vpop.permute.xlu0 %1021
  %v1024 = vmul.f32 %v1017, %v1022
  %1026 = vrot.lane.b32.xlu0 %v1024, 32
  %v1027 = vpop.permute.xlu0 %1026
  %v1029 = vadd.f32 %v1019, %v1027
  %v1030 = vtanh.pop %v1029
  %1032 = vrot.lane.b32.xlu0 %v1030, 64
  %v1033 = vpop.permute.xlu0 %1032
  %v1035 = vmul.f32 %v1017, %v1033
  %1037 = vrot.lane.b32.xlu0 %v1035, 32
  %v1038 = vpop.permute.xlu0 %1037
  %v1039 = vsel %vm54, %v1038, 0
  %1041 = vmatpush.msra.mxu0 0.0
  %1042 = vmatpush.msra.mxu0 0.0
  %1043 = vmatpush.msra.mxu0 0.0
  %1044 = vmatpush.msra.mxu0 0.0
  %1045 = vmatpush.msra.mxu0 0.0
  %1046 = vmatpush.msra.mxu0 0.0
  %1047 = vmatpush.msra.mxu0 0.0
  %1048 = vmatpush.msra.mxu0 0.0
  %1049 = vmatpush.msra.mxu0 0.0
  %1050 = vmatpush.msra.mxu0 0.0
  %1051 = vmatpush.msra.mxu0 0.0
  %1052 = vmatpush.msra.mxu0 0.0
  %1053 = vmatpush.msra.mxu0 %v656
  %1054 = vmatpush.msra.mxu0 %v655
  %1055 = vmatpush.msra.mxu0 %v654
  %1056 = vmatpush.msra.mxu0 %v653
  %1057 = vmatmul.f32.gmra.mxu0 %v1039
  %v1058 = vpop.f32.mrf.mxu0
  %v1059 = vadd.f32 0.0, %v1058
  %1060 = vdwg.mxu0
  %v1061 = vadd.f32 %v718, %v1059
  %v1062 = vxor.u32 %v1061, 2147483648
  %v1063 = vmul.f32 %v1062, 1.442695
  %v1064 = vpow.pop %v1063
  %v1065 = vadd.f32 %v1064, 1.0
  %v1066 = vrcp.pop %v1065
  %v1067 = vmul.f32 %v1065, %v1066
  %v1068 = vsub.f32 1.0, %v1067
  %v1069 = vmul.f32 %v1066, %v1068
  %v1070 = vadd.f32 %v1066, %v1069
  %vm1071 = vweird.f32 %v1065
  %vm1072 = vweird.f32 %v1066
  %vm1073 = vmor %vm1071, %vm1072
  %v1074 = vsel %vm1073, %v1066, %v1070
  %v1075 = vand.u32 2147483647, %v1065
  %vm1076 = vcmp.eq.f32.partialorder %v1075, 8.507059e+37
  %v1077 = vand.u32 %v1065, 2147483648
  %v1078 = vor.u32 1.1754944e-38, %v1077
  %v1079 = vsel %vm1076, %v1078, %v1074
  %v1080 = vmul.f32 1.0, %v1079
  %v1081 = vtanh.pop %v1061
  %v1082 = vmul.f32 %v1080, %v1029
  %1084 = vrot.lane.b32.xlu0 %v1081, 64
  %v1085 = vpop.permute.xlu0 %1084
  %v1087 = vmul.f32 %v1080, %v1085
  %1089 = vrot.lane.b32.xlu0 %v1087, 32
  %v1090 = vpop.permute.xlu0 %1089
  %v1092 = vadd.f32 %v1082, %v1090
  %v1093 = vtanh.pop %v1092
  %1095 = vrot.lane.b32.xlu0 %v1093, 64
  %v1096 = vpop.permute.xlu0 %1095
  %v1098 = vmul.f32 %v1080, %v1096
  %1100 = vrot.lane.b32.xlu0 %v1098, 32
  %v1101 = vpop.permute.xlu0 %1100
  %v1102 = vsel %vm54, %v1101, 0
  %1104 = vmatpush.msra.mxu0 0.0
  %1105 = vmatpush.msra.mxu0 0.0
  %1106 = vmatpush.msra.mxu0 0.0
  %1107 = vmatpush.msra.mxu0 0.0
  %1108 = vmatpush.msra.mxu0 0.0
  %1109 = vmatpush.msra.mxu0 0.0
  %1110 = vmatpush.msra.mxu0 0.0
  %1111 = vmatpush.msra.mxu0 0.0
  %1112 = vmatpush.msra.mxu0 0.0
  %1113 = vmatpush.msra.mxu0 0.0
  %1114 = vmatpush.msra.mxu0 0.0
  %1115 = vmatpush.msra.mxu0 0.0
  %1116 = vmatpush.msra.mxu0 %v656
  %1117 = vmatpush.msra.mxu0 %v655
  %1118 = vmatpush.msra.mxu0 %v654
  %1119 = vmatpush.msra.mxu0 %v653
  %1120 = vmatmul.f32.gmra.mxu0 %v1102
  %v1121 = vpop.f32.mrf.mxu0
  %v1122 = vadd.f32 0.0, %v1121
  %1123 = vdwg.mxu0
  %v1124 = vadd.f32 %v721, %v1122
  %v1125 = vxor.u32 %v1124, 2147483648
  %v1126 = vmul.f32 %v1125, 1.442695
  %v1127 = vpow.pop %v1126
  %v1128 = vadd.f32 %v1127, 1.0
  %v1129 = vrcp.pop %v1128
  %v1130 = vmul.f32 %v1128, %v1129
  %v1131 = vsub.f32 1.0, %v1130
  %v1132 = vmul.f32 %v1129, %v1131
  %v1133 = vadd.f32 %v1129, %v1132
  %vm1134 = vweird.f32 %v1128
  %vm1135 = vweird.f32 %v1129
  %vm1136 = vmor %vm1134, %vm1135
  %v1137 = vsel %vm1136, %v1129, %v1133
  %v1138 = vand.u32 2147483647, %v1128
  %vm1139 = vcmp.eq.f32.partialorder %v1138, 8.507059e+37
  %v1140 = vand.u32 %v1128, 2147483648
  %v1141 = vor.u32 1.1754944e-38, %v1140
  %v1142 = vsel %vm1139, %v1141, %v1137
  %v1143 = vmul.f32 1.0, %v1142
  %v1144 = vtanh.pop %v1124
  %v1145 = vmul.f32 %v1143, %v1092
  %1147 = vrot.lane.b32.xlu0 %v1144, 64
  %v1148 = vpop.permute.xlu0 %1147
  %v1150 = vmul.f32 %v1143, %v1148
  %1152 = vrot.lane.b32.xlu0 %v1150, 32
  %v1153 = vpop.permute.xlu0 %1152
  %v1155 = vadd.f32 %v1145, %v1153
  %v1156 = vtanh.pop %v1155
  %1158 = vrot.lane.b32.xlu0 %v1156, 64
  %v1159 = vpop.permute.xlu0 %1158
  %v1161 = vmul.f32 %v1143, %v1159
  %1163 = vrot.lane.b32.xlu0 %v1161, 32
  %v1164 = vpop.permute.xlu0 %1163
  %v1165 = vsel %vm54, %v1164, 0
  %1167 = vmatpush.msra.mxu0 0.0
  %1168 = vmatpush.msra.mxu0 0.0
  %1169 = vmatpush.msra.mxu0 0.0
  %1170 = vmatpush.msra.mxu0 0.0
  %1171 = vmatpush.msra.mxu0 0.0
  %1172 = vmatpush.msra.mxu0 0.0
  %1173 = vmatpush.msra.mxu0 0.0
  %1174 = vmatpush.msra.mxu0 0.0
  %1175 = vmatpush.msra.mxu0 0.0
  %1176 = vmatpush.msra.mxu0 0.0
  %1177 = vmatpush.msra.mxu0 0.0
  %1178 = vmatpush.msra.mxu0 0.0
  %1179 = vmatpush.msra.mxu0 %v656
  %1180 = vmatpush.msra.mxu0 %v655
  %1181 = vmatpush.msra.mxu0 %v654
  %1182 = vmatpush.msra.mxu0 %v653
  %1183 = vmatmul.f32.gmra.mxu0 %v1165
  %v1184 = vpop.f32.mrf.mxu0
  %v1185 = vadd.f32 0.0, %v1184
  %1186 = vdwg.mxu0
  %v1187 = vadd.f32 %v724, %v1185
  %v1188 = vxor.u32 %v1187, 2147483648
  %v1189 = vmul.f32 %v1188, 1.442695
  %v1190 = vpow.pop %v1189
  %v1191 = vadd.f32 %v1190, 1.0
  %v1192 = vrcp.pop %v1191
  %v1193 = vmul.f32 %v1191, %v1192
  %v1194 = vsub.f32 1.0, %v1193
  %v1195 = vmul.f32 %v1192, %v1194
  %v1196 = vadd.f32 %v1192, %v1195
  %vm1197 = vweird.f32 %v1191
  %vm1198 = vweird.f32 %v1192
  %vm1199 = vmor %vm1197, %vm1198
  %v1200 = vsel %vm1199, %v1192, %v1196
  %v1201 = vand.u32 2147483647, %v1191
  %vm1202 = vcmp.eq.f32.partialorder %v1201, 8.507059e+37
  %v1203 = vand.u32 %v1191, 2147483648
  %v1204 = vor.u32 1.1754944e-38, %v1203
  %v1205 = vsel %vm1202, %v1204, %v1200
  %v1206 = vmul.f32 1.0, %v1205
  %v1207 = vtanh.pop %v1187
  %v1208 = vmul.f32 %v1206, %v1155
  %1210 = vrot.lane.b32.xlu0 %v1207, 64
  %v1211 = vpop.permute.xlu0 %1210
  %v1213 = vmul.f32 %v1206, %v1211
  %1215 = vrot.lane.b32.xlu0 %v1213, 32
  %v1216 = vpop.permute.xlu0 %1215
  %v1218 = vadd.f32 %v1208, %v1216
  %v1219 = vtanh.pop %v1218
  %1221 = vrot.lane.b32.xlu0 %v1219, 64
  %v1222 = vpop.permute.xlu0 %1221
  %v1224 = vmul.f32 %v1206, %v1222
  %v1225 = vld [vmem:[%s7] sm:$0x1]
  %v1227 = vperm.slane %v1225, 0
  %1228 = vrot.lane.b32.xlu0 %v1227, 96
  %v1229 = vpop.permute.xlu0 %1228
  %v1231 = vmul.f32 %v1224, %v1229
  %1233 = vrot.lane.b32.xlu0 %v1231, 32
  %v1234 = vpop.permute.xlu0 %1233
  %v1236 = vsel %vm54, %v1234, 0.0
  %1237 = vadd.xlane.f32.xlu0 %v1236
  %v1238 = vpop.xlane.xlu0 %1237
  %v1239 = vld [vmem:[#allocation3] sm:$0x1]
  %v1241 = vperm.slane %v1239, 0
  %v1243 = vadd.f32 %v1238, %v1241
  %v1244 = vmul.f32 %v1243, 1.442695
  %v1245 = vpow.pop %v1244
  %v1247 = vrot.slane %v1245, 2
  %v1249 = vadd.f32 %v1245, %v1247
  %v1250 = vrcp.pop %v1249
  %v1251 = vmul.f32 %v1249, %v1250
  %v1252 = vsub.f32 1.0, %v1251
  %v1253 = vmul.f32 %v1250, %v1252
  %v1254 = vadd.f32 %v1250, %v1253
  %vm1255 = vweird.f32 %v1249
  %vm1256 = vweird.f32 %v1250
  %vm1257 = vmor %vm1255, %vm1256
  %v1258 = vsel %vm1257, %v1250, %v1254
  %v1259 = vand.u32 2147483647, %v1249
  %vm1260 = vcmp.eq.f32.partialorder %v1259, 8.507059e+37
  %v1261 = vand.u32 %v1249, 2147483648
  %v1262 = vor.u32 1.1754944e-38, %v1261
  %v1263 = vsel %vm1260, %v1262, %v1258
  %v1264 = vmul.f32 %v1245, %v1263
  %1265 = vst [vmem:[%s9] sm:$0xff] 0.0
  %1267 = vset.pattern.permute.xlu0 0
  %1268 = vperm.xlu0 %1267, %v1264
  %v1269 = vpop.permute.xlu0 %1268
  %1271 = vst [vmem:[%s9] sm:$0x3] %v1269
  // Predicated region
  $region38: #{lstm_model_forward.1} parent=0 // pred_check
    _
  $region39: #{lstm_model_forward.1} parent=0 // pred_check_branch
    %1273 = sbr.rel (0) target = $region41
  $region40: #{lstm_model_forward.1} parent=0 // pred_region
    _
  $region41: #{lstm_model_forward.1} parent=0 // pred_fallthru
    _
  // Predicated region
  $region42: #{lstm_model_forward.1} parent=0 // pred_check
    _
  $region43: #{lstm_model_forward.1} parent=0 // pred_check_branch
    %1275 = sbr.rel (0) target = $region45
  $region44: #{lstm_model_forward.1} parent=0 // pred_region
    _
  $region45: #{lstm_model_forward.1} parent=0 // pred_fallthru
    _

</llo_original>
